<compile_context>
chip_gen: v6e
topology: v6e:2x2x1
jax: 0.10.0
libtpu: 0.0.40
codegen_flags: <defaults>
</compile_context>

<pallas_src>
import functools

import numpy as np
import jax
import jax.numpy as jnp
from jax import lax
from jax.experimental import pallas as pl
from jax.experimental.pallas import tpu as pltpu


LANE = 128                                   # lane width (last-dim padding)
VMEM_LIMIT = 48 * 1024 * 1024                # scoped VMEM, safe on v5e/v6e/v7x
RESIDENT_H_BYTES = 12 * 1024 * 1024          # keep H VMEM-resident below this
FUSED_VMEM_BUDGET = 16 * 1024 * 1024         # fully-fused path budget (bf16)


def _round_up(x, m):
    return (x + m - 1) // m * m


def _choose_tiles(n):
    """Tile sizes for the streaming path (bigger tiles -> better HBM roofline)."""
    if n >= 4096:
        return 256, 512
    if n >= 1024:
        return 256, 256
    return 128, 128


def _pad2d(a, rows, cols, dtype):
    return jnp.zeros((rows, cols), dtype).at[:a.shape[0], :a.shape[1]].set(
        a.astype(dtype))


# ============================================================================
# Path 1: fully fused single kernel (small/mid graphs — everything in VMEM).
# ============================================================================
def _gcn_fused_kernel(a_ref, x_ref, w1_ref, b1_ref, w2_ref, b2_ref,
                      w3_ref, b3_ref, p_ref, wl_ref, bl_ref, out_ref):
    a = a_ref[...]

    def conv(h_bf16, w_ref, b_ref, relu):
        agg = jnp.dot(a, h_bf16, preferred_element_type=jnp.float32)
        out = jnp.dot(agg.astype(jnp.bfloat16), w_ref[...],
                      preferred_element_type=jnp.float32) + b_ref[...]
        if relu:
            out = jnp.maximum(out, 0.0)
        return out.astype(jnp.bfloat16)

    h1 = conv(x_ref[...], w1_ref, b1_ref, True)
    h2 = conv(h1, w2_ref, b2_ref, True)
    h3 = conv(h2, w3_ref, b3_ref, False)
    pooled = jnp.dot(p_ref[...], h3, preferred_element_type=jnp.float32)
    # TODO(synk): F.dropout(p=0.4) is identity in eval mode; training-mode
    # masking would use pltpu.prng_seed / pltpu.prng_random_bits here.
    out_ref[...] = jnp.dot(pooled.astype(jnp.bfloat16), wl_ref[...],
                           preferred_element_type=jnp.float32) + bl_ref[...]


def gcn_forward_fused(a_hat, x, params, pool_mat):
    """Single-kernel GCN forward: A read from HBM once, no intermediate HBM."""
    (w1, b1, w2, b2, w3, b3, wl, bl) = params
    n, f = x.shape
    g = pool_mat.shape[0]
    c = wl.shape[1]
    hdim = w1.shape[1]

    n_pad = _round_up(n, 128)
    f_pad = _round_up(f, LANE)
    h_pad = _round_up(hdim, LANE)
    c_pad = _round_up(c, LANE)
    g_pad = _round_up(g, 8)

    a_p = _pad2d(a_hat, n_pad, n_pad, jnp.bfloat16)
    x_p = _pad2d(x, n_pad, f_pad, jnp.bfloat16)
    p_p = _pad2d(pool_mat, g_pad, n_pad, jnp.bfloat16)
    w1p = _pad2d(w1, f_pad, h_pad, jnp.bfloat16)
    w2p = _pad2d(w2, h_pad, h_pad, jnp.bfloat16)
    w3p = _pad2d(w3, h_pad, h_pad, jnp.bfloat16)
    wlp = _pad2d(wl, h_pad, c_pad, jnp.bfloat16)
    b1p = _pad2d(b1.reshape(1, -1), 1, h_pad, jnp.float32)
    b2p = _pad2d(b2.reshape(1, -1), 1, h_pad, jnp.float32)
    b3p = _pad2d(b3.reshape(1, -1), 1, h_pad, jnp.float32)
    blp = _pad2d(bl.reshape(1, -1), 1, c_pad, jnp.float32)

    out = pl.pallas_call(
        _gcn_fused_kernel,
        out_shape=jax.ShapeDtypeStruct((g_pad, c_pad), jnp.float32),
        compiler_params=pltpu.CompilerParams(vmem_limit_bytes=VMEM_LIMIT),
    )(a_p, x_p, w1p, b1p, w2p, b2p, w3p, b3p, p_p, wlp, blp)
    return out[:g, :c]


# ============================================================================
# Path 2: tiled, block-sparse streaming kernels (large graphs).
# Flattened 1-D grid over nonzero A_hat tiles: scalar-prefetched
# (row_idx[t], col_idx[t]); accumulator zeroed when the row tile changes and
# finalized when it is about to change / on the last step.
# ============================================================================
def _gcn_layer_kernel(row_ref, col_ref,            # scalar prefetch (SMEM)
                      a_ref, h_ref, w_ref, b_ref,  # VMEM blocks
                      o_ref,                       # output row-tile
                      acc_ref,                     # f32 accumulator scratch
                      *, apply_relu, h_resident, tk):
    t = pl.program_id(0)
    nt = pl.num_programs(0)
    row = row_ref[t]
    prev_row = row_ref[jnp.maximum(t - 1, 0)]
    next_row = row_ref[jnp.minimum(t + 1, nt - 1)]
    is_first = jnp.logical_or(t == 0, row != prev_row)
    is_last = jnp.logical_or(t == nt - 1, row != next_row)

    @pl.when(is_first)
    def _():
        acc_ref[...] = jnp.zeros_like(acc_ref)

    if h_resident:
        c = col_ref[t]
        h_tile = h_ref[pl.ds(pl.multiple_of(c * tk, tk), tk), :]
    else:
        h_tile = h_ref[...]
    acc_ref[...] += jnp.dot(a_ref[...], h_tile,
                            preferred_element_type=jnp.float32)

    @pl.when(is_last)
    def _():
        out = jnp.dot(acc_ref[...].astype(jnp.bfloat16), w_ref[...],
                      preferred_element_type=jnp.float32) + b_ref[...]
        if apply_relu:
            out = jnp.maximum(out, 0.0)
        o_ref[...] = out.astype(o_ref.dtype)


def _gcn_head_kernel(row_ref, col_ref,
                     a_ref, h_ref, w_ref, b_ref, p_ref, wl_ref, bl_ref,
                     out_ref,
                     acc_ref, pool_ref,
                     *, h_resident, tk):
    """conv3 (no ReLU) + global mean pool + final Linear, fused."""
    t = pl.program_id(0)
    nt = pl.num_programs(0)
    row = row_ref[t]
    prev_row = row_ref[jnp.maximum(t - 1, 0)]
    next_row = row_ref[jnp.minimum(t + 1, nt - 1)]
    is_first = jnp.logical_or(t == 0, row != prev_row)
    is_last = jnp.logical_or(t == nt - 1, row != next_row)

    @pl.when(t == 0)
    def _():
        pool_ref[...] = jnp.zeros_like(pool_ref)

    @pl.when(is_first)
    def _():
        acc_ref[...] = jnp.zeros_like(acc_ref)

    if h_resident:
        c = col_ref[t]
        h_tile = h_ref[pl.ds(pl.multiple_of(c * tk, tk), tk), :]
    else:
        h_tile = h_ref[...]
    acc_ref[...] += jnp.dot(a_ref[...], h_tile,
                            preferred_element_type=jnp.float32)

    @pl.when(is_last)
    def _():
        h3 = jnp.dot(acc_ref[...].astype(jnp.bfloat16), w_ref[...],
                     preferred_element_type=jnp.float32) + b_ref[...]
        pool_ref[...] += jnp.dot(p_ref[...], h3.astype(jnp.bfloat16),
                                 preferred_element_type=jnp.float32)

    @pl.when(t == nt - 1)
    def _():
        # TODO(synk): dropout (p=0.4) is identity in eval mode; training mode
        # would mask pool_ref with pltpu.prng_random_bits before the Linear.
        out_ref[...] = jnp.dot(pool_ref[...].astype(jnp.bfloat16), wl_ref[...],
                               preferred_element_type=jnp.float32) + bl_ref[...]


def _h_spec(n_pad, fin, tk, h_resident):
    if h_resident:
        return pl.BlockSpec((n_pad, fin), lambda t, ri, ci: (0, 0))
    return pl.BlockSpec((tk, fin), lambda t, ri, ci: (ci[t], 0))


def gcn_layer(a_p, h_p, w_p, b_p, row_idx, col_idx, *, tm, tk, apply_relu):
    n_pad = a_p.shape[0]
    fin = h_p.shape[1]
    fout = w_p.shape[1]
    nt = row_idx.shape[0]
    h_resident = (n_pad * fin * 2) <= RESIDENT_H_BYTES

    kernel = functools.partial(_gcn_layer_kernel, apply_relu=apply_relu,
                               h_resident=h_resident, tk=tk)
    grid_spec = pltpu.PrefetchScalarGridSpec(
        num_scalar_prefetch=2,
        grid=(nt,),
        in_specs=[
            pl.BlockSpec((tm, tk), lambda t, ri, ci: (ri[t], ci[t])),
            _h_spec(n_pad, fin, tk, h_resident),
            pl.BlockSpec((fin, fout), lambda t, ri, ci: (0, 0)),
            pl.BlockSpec((1, fout), lambda t, ri, ci: (0, 0)),
        ],
        out_specs=pl.BlockSpec((tm, fout), lambda t, ri, ci: (ri[t], 0)),
        scratch_shapes=[pltpu.VMEM((tm, fin), jnp.float32)],
    )
    return pl.pallas_call(
        kernel,
        out_shape=jax.ShapeDtypeStruct((n_pad, fout), jnp.bfloat16),
        grid_spec=grid_spec,
        compiler_params=pltpu.CompilerParams(
            dimension_semantics=("arbitrary",),
            vmem_limit_bytes=VMEM_LIMIT),
    )(row_idx, col_idx, a_p, h_p, w_p, b_p)


def gcn_final_layer_pool_classify(a_p, h_p, w_p, b_p, p_p, wl_p, bl_p,
                                  row_idx, col_idx, *, tm, tk):
    n_pad = a_p.shape[0]
    fin = h_p.shape[1]
    fout = w_p.shape[1]
    g_pad = p_p.shape[0]
    c_pad = wl_p.shape[1]
    nt = row_idx.shape[0]
    h_resident = (n_pad * fin * 2) <= RESIDENT_H_BYTES

    kernel = functools.partial(_gcn_head_kernel, h_resident=h_resident, tk=tk)
    grid_spec = pltpu.PrefetchScalarGridSpec(
        num_scalar_prefetch=2,
        grid=(nt,),
        in_specs=[
            pl.BlockSpec((tm, tk), lambda t, ri, ci: (ri[t], ci[t])),
            _h_spec(n_pad, fin, tk, h_resident),
            pl.BlockSpec((fin, fout), lambda t, ri, ci: (0, 0)),
            pl.BlockSpec((1, fout), lambda t, ri, ci: (0, 0)),
            pl.BlockSpec((g_pad, tm), lambda t, ri, ci: (0, ri[t])),
            pl.BlockSpec((fout, c_pad), lambda t, ri, ci: (0, 0)),
            pl.BlockSpec((1, c_pad), lambda t, ri, ci: (0, 0)),
        ],
        out_specs=pl.BlockSpec((g_pad, c_pad), lambda t, ri, ci: (0, 0)),
        scratch_shapes=[pltpu.VMEM((tm, fin), jnp.float32),
                        pltpu.VMEM((g_pad, fout), jnp.float32)],
    )
    return pl.pallas_call(
        kernel,
        out_shape=jax.ShapeDtypeStruct((g_pad, c_pad), jnp.float32),
        grid_spec=grid_spec,
        compiler_params=pltpu.CompilerParams(
            dimension_semantics=("arbitrary",),
            vmem_limit_bytes=VMEM_LIMIT),
    )(row_idx, col_idx, a_p, h_p, w_p, b_p, p_p, wl_p, bl_p)


def _block_structure(a_hat_np, n_pad, tm, tk):
    """Flattened list of nonzero (row_tile, col_tile) pairs of padded A_hat.

    Rows appear in increasing order (their tiles are contiguous in the list) so
    the kernel can detect row changes for init/finalize. Every row tile appears
    at least once so every output row tile gets written (no uninitialized HBM
    is ever read back). Requires a concrete (host) A_hat; the resulting list
    length is a static grid extent.
    """
    n = a_hat_np.shape[0]
    a_np = np.zeros((n_pad, n_pad), np.float32)
    a_np[:n, :n] = a_hat_np
    r, kt = n_pad // tm, n_pad // tk
    mask = a_np.reshape(r, tm, kt, tk).any(axis=(1, 3))   # [r, kt]
    rows, cols = [], []
    for i in range(r):
        nz = np.nonzero(mask[i])[0]
        if nz.size == 0:
            nz = np.array([min((i * tm) // tk, kt - 1)])  # all-zero fallback
        rows.append(np.full(nz.size, i, np.int32))
        cols.append(nz.astype(np.int32))
    return jnp.asarray(np.concatenate(rows)), jnp.asarray(np.concatenate(cols))


def gcn_forward_tiled(a_hat, x, params, pool_mat):
    """Tiled/streaming GCN forward (conv1, conv2, conv3+pool+Linear fused)."""
    (w1, b1, w2, b2, w3, b3, wl, bl) = params
    n, f = x.shape
    g = pool_mat.shape[0]
    c = wl.shape[1]
    hdim = w1.shape[1]

    tm, tk = _choose_tiles(n)
    n_pad = _round_up(n, max(tm, tk))
    f_pad = _round_up(f, LANE)
    h_pad = _round_up(hdim, LANE)
    c_pad = _round_up(c, LANE)
    g_pad = _round_up(g, 8)

    row_idx, col_idx = _block_structure(np.asarray(a_hat, np.float32),
                                        n_pad, tm, tk)

    a_p = _pad2d(a_hat, n_pad, n_pad, jnp.bfloat16)
    x_p = _pad2d(x, n_pad, f_pad, jnp.bfloat16)
    p_p = _pad2d(pool_mat, g_pad, n_pad, jnp.bfloat16)
    w1p = _pad2d(w1, f_pad, h_pad, jnp.bfloat16)
    w2p = _pad2d(w2, h_pad, h_pad, jnp.bfloat16)
    w3p = _pad2d(w3, h_pad, h_pad, jnp.bfloat16)
    wlp = _pad2d(wl, h_pad, c_pad, jnp.bfloat16)
    b1p = _pad2d(b1.reshape(1, -1), 1, h_pad, jnp.float32)
    b2p = _pad2d(b2.reshape(1, -1), 1, h_pad, jnp.float32)
    b3p = _pad2d(b3.reshape(1, -1), 1, h_pad, jnp.float32)
    blp = _pad2d(bl.reshape(1, -1), 1, c_pad, jnp.float32)

    h1 = gcn_layer(a_p, x_p, w1p, b1p, row_idx, col_idx,
                   tm=tm, tk=tk, apply_relu=True)
    h2 = gcn_layer(a_p, h1, w2p, b2p, row_idx, col_idx,
                   tm=tm, tk=tk, apply_relu=True)
    out = gcn_final_layer_pool_classify(a_p, h2, w3p, b3p, p_p, wlp, blp,
                                        row_idx, col_idx, tm=tm, tk=tk)
    return out[:g, :c]


def gcn_forward(a_hat, x, params, pool_mat):
    """Dispatch: fully fused kernel when the padded problem fits VMEM."""
    n, f = x.shape
    hdim = params[0].shape[1]
    n_pad = _round_up(n, 128)
    feat = _round_up(max(f, hdim), LANE)
    fused_bytes = 2 * (n_pad * n_pad + 3 * n_pad * feat)   # A + activations, bf16
    if fused_bytes <= FUSED_VMEM_BUDGET:
        return gcn_forward_fused(a_hat, x, params, pool_mat)
    return gcn_forward_tiled(a_hat, x, params, pool_mat)


# -------------------------- host-side helpers --------------------------------
def normalized_adjacency(edge_index, num_nodes):
    """Dense D^-1/2 (A + I) D^-1/2 (matches PyG gcn_norm for symmetric edges).

    Note: for directed edge lists PyG's normalization differs; symmetrize the
    edge_index beforehand if needed.
    """
    src, dst = edge_index[0], edge_index[1]
    a = jnp.zeros((num_nodes, num_nodes), jnp.float32)
    a = a.at[dst, src].add(1.0)
    a = a + jnp.eye(num_nodes, dtype=jnp.float32)
    deg = a.sum(axis=1)
    dinv = jnp.where(deg > 0, lax.rsqrt(deg), 0.0)
    return dinv[:, None] * a * dinv[None, :]


def mean_pool_matrix(batch, num_graphs):
    onehot = (jnp.arange(num_graphs)[:, None] == batch[None, :]).astype(jnp.float32)
    counts = onehot.sum(axis=1, keepdims=True)
    return onehot / jnp.maximum(counts, 1.0)


def init_params(key, num_node_features, hidden_channels, num_classes):
    ks = jax.random.split(key, 4)

    def glorot(k, fan_in, fan_out):
        scale = jnp.sqrt(6.0 / (fan_in + fan_out))
        return jax.random.uniform(k, (fan_in, fan_out), jnp.float32, -scale, scale)

    w1 = glorot(ks[0], num_node_features, hidden_channels)
    w2 = glorot(ks[1], hidden_channels, hidden_channels)
    w3 = glorot(ks[2], hidden_channels, hidden_channels)
    wl = glorot(ks[3], hidden_channels, num_classes)
    b1 = jnp.zeros((1, hidden_channels), jnp.float32)
    b2 = jnp.zeros((1, hidden_channels), jnp.float32)
    b3 = jnp.zeros((1, hidden_channels), jnp.float32)
    bl = jnp.zeros((1, num_classes), jnp.float32)
    return (w1, b1, w2, b2, w3, b3, wl, bl)


def gcn_reference(a_hat, x, params, pool_mat):
    """Pure-JAX f32 reference (same math, eval mode)."""
    (w1, b1, w2, b2, w3, b3, wl, bl) = params
    h = jnp.maximum(a_hat @ (x @ w1) + b1, 0.0)
    h = jnp.maximum(a_hat @ (h @ w2) + b2, 0.0)
    h = a_hat @ (h @ w3) + b3
    return (pool_mat @ h) @ wl + bl


# ------------------------------- main ----------------------------------------
if __name__ == "__main__":
    # 32 graphs x 8 nodes (undirected ring each): 256 nodes -> two full 128-row
    # tiles of real data, block-diagonal A with 2 nonzero 128x128 tiles.
    N_PER_GRAPH = 8
    NUM_GRAPHS = 32
    N = N_PER_GRAPH * NUM_GRAPHS
    NUM_NODE_FEATURES = 8
    HIDDEN_CHANNELS = 32
    NUM_CLASSES = 4

    srcs, dsts = [], []
    for gidx in range(NUM_GRAPHS):
        off = gidx * N_PER_GRAPH
        for i in range(N_PER_GRAPH):
            j = (i + 1) % N_PER_GRAPH
            srcs += [off + i, off + j]
            dsts += [off + j, off + i]
    edge_index = jnp.array([srcs, dsts], dtype=jnp.int32)          # [2, 512]
    batch = jnp.repeat(jnp.arange(NUM_GRAPHS, dtype=jnp.int32), N_PER_GRAPH)

    key = jax.random.PRNGKey(0)
    k_x, k_p = jax.random.split(key)
    x = jax.random.normal(k_x, (N, NUM_NODE_FEATURES), jnp.float32)
    params = init_params(k_p, NUM_NODE_FEATURES, HIDDEN_CHANNELS, NUM_CLASSES)

    a_hat = normalized_adjacency(edge_index, N)                    # [N, N]
    pool_mat = mean_pool_matrix(batch, NUM_GRAPHS)                 # [G, N]

    ref = gcn_reference(a_hat, x, params, pool_mat)

    # Path 1: fully fused single kernel (A resident; small/mid graphs).
    out_fused = jax.block_until_ready(gcn_forward_fused(a_hat, x, params, pool_mat))
    # Path 2: tiled block-sparse streaming path (large graphs), exercised here too.
    out_tiled = jax.block_until_ready(gcn_forward_tiled(a_hat, x, params, pool_mat))
    # Dispatcher picks the fused path at these sizes.
    out = jax.block_until_ready(gcn_forward(a_hat, x, params, pool_mat))

    for name, o in (("fused", out_fused), ("tiled", out_tiled), ("dispatch", out)):
        assert o.shape == (NUM_GRAPHS, NUM_CLASSES), (name, o.shape)
        assert bool(jnp.all(jnp.isfinite(o))), name
        err = float(jnp.max(jnp.abs(o - ref)))
        # Loose tolerance vs f32 reference (bf16 MXU inputs, f32 accumulation).
        assert err < 0.1, f"{name}: max abs error vs f32 reference too large: {err}"

    xerr = float(jnp.max(jnp.abs(out_fused - out_tiled)))
    assert xerr < 0.1, f"fused vs tiled paths disagree: {xerr}"

    print("KERNEL_OK")
</pallas_src>

<mosaic_0001>
module attributes {stable_mosaic.version = 11 : i64} {
  func.func @_gcn_fused_kernel(%arg0: memref<256x256xbf16, #tpu.memory_space<vmem>>, %arg1: memref<256x128xbf16, #tpu.memory_space<vmem>>, %arg2: memref<128x128xbf16, #tpu.memory_space<vmem>>, %arg3: memref<1x128xf32, #tpu.memory_space<vmem>>, %arg4: memref<128x128xbf16, #tpu.memory_space<vmem>>, %arg5: memref<1x128xf32, #tpu.memory_space<vmem>>, %arg6: memref<128x128xbf16, #tpu.memory_space<vmem>>, %arg7: memref<1x128xf32, #tpu.memory_space<vmem>>, %arg8: memref<32x256xbf16, #tpu.memory_space<vmem>>, %arg9: memref<128x128xbf16, #tpu.memory_space<vmem>>, %arg10: memref<1x128xf32, #tpu.memory_space<vmem>>, %arg11: memref<32x128xf32, #tpu.memory_space<vmem>>) attributes {dimension_semantics = [], scalar_prefetch = 0 : i64, scratch_operands = 0 : i64, tpu.core_type = #tpu.core_type<tc>} {
    %c0 = arith.constant 0 : index
    %c0_0 = arith.constant 0 : index
    %0 = vector.load %arg0[%c0, %c0_0] : memref<256x256xbf16, #tpu.memory_space<vmem>>, vector<256x256xbf16>
    %c0_1 = arith.constant 0 : index
    %c0_2 = arith.constant 0 : index
    %1 = vector.load %arg1[%c0_1, %c0_2] : memref<256x128xbf16, #tpu.memory_space<vmem>>, vector<256x128xbf16>
    %cst = arith.constant dense<0.000000e+00> : vector<256x128xf32>
    %2 = tpu.matmul %0, %1, %cst {dimension_numbers = #tpu.dot_dimension_numbers<[1], [0], [0], [1], [0, 0, 1, 1], [], []>} : vector<256x256xbf16>, vector<256x128xbf16>, vector<256x128xf32> -> vector<256x128xf32>
    %3 = arith.truncf %2 : vector<256x128xf32> to vector<256x128xbf16>
    %c0_3 = arith.constant 0 : index
    %c0_4 = arith.constant 0 : index
    %4 = vector.load %arg2[%c0_3, %c0_4] : memref<128x128xbf16, #tpu.memory_space<vmem>>, vector<128x128xbf16>
    %cst_5 = arith.constant dense<0.000000e+00> : vector<256x128xf32>
    %5 = tpu.matmul %3, %4, %cst_5 {dimension_numbers = #tpu.dot_dimension_numbers<[1], [0], [0], [1], [0, 0, 1, 1], [], []>} : vector<256x128xbf16>, vector<128x128xbf16>, vector<256x128xf32> -> vector<256x128xf32>
    %c0_6 = arith.constant 0 : index
    %c0_7 = arith.constant 0 : index
    %6 = vector.load %arg3[%c0_6, %c0_7] : memref<1x128xf32, #tpu.memory_space<vmem>>, vector<1x128xf32>
    %7 = vector.broadcast %6 : vector<1x128xf32> to vector<256x128xf32>
    %8 = arith.addf %5, %7 : vector<256x128xf32>
    %cst_8 = arith.constant 0.000000e+00 : f32
    %9 = vector.broadcast %cst_8 : f32 to vector<256x128xf32>
    %10 = arith.maximumf %8, %9 : vector<256x128xf32>
    %11 = arith.truncf %10 : vector<256x128xf32> to vector<256x128xbf16>
    %cst_9 = arith.constant dense<0.000000e+00> : vector<256x128xf32>
    %12 = tpu.matmul %0, %11, %cst_9 {dimension_numbers = #tpu.dot_dimension_numbers<[1], [0], [0], [1], [0, 0, 1, 1], [], []>} : vector<256x256xbf16>, vector<256x128xbf16>, vector<256x128xf32> -> vector<256x128xf32>
    %13 = arith.truncf %12 : vector<256x128xf32> to vector<256x128xbf16>
    %c0_10 = arith.constant 0 : index
    %c0_11 = arith.constant 0 : index
    %14 = vector.load %arg4[%c0_10, %c0_11] : memref<128x128xbf16, #tpu.memory_space<vmem>>, vector<128x128xbf16>
    %cst_12 = arith.constant dense<0.000000e+00> : vector<256x128xf32>
    %15 = tpu.matmul %13, %14, %cst_12 {dimension_numbers = #tpu.dot_dimension_numbers<[1], [0], [0], [1], [0, 0, 1, 1], [], []>} : vector<256x128xbf16>, vector<128x128xbf16>, vector<256x128xf32> -> vector<256x128xf32>
    %c0_13 = arith.constant 0 : index
    %c0_14 = arith.constant 0 : index
    %16 = vector.load %arg5[%c0_13, %c0_14] : memref<1x128xf32, #tpu.memory_space<vmem>>, vector<1x128xf32>
    %17 = vector.broadcast %16 : vector<1x128xf32> to vector<256x128xf32>
    %18 = arith.addf %15, %17 : vector<256x128xf32>
    %cst_15 = arith.constant 0.000000e+00 : f32
    %19 = vector.broadcast %cst_15 : f32 to vector<256x128xf32>
    %20 = arith.maximumf %18, %19 : vector<256x128xf32>
    %21 = arith.truncf %20 : vector<256x128xf32> to vector<256x128xbf16>
    %cst_16 = arith.constant dense<0.000000e+00> : vector<256x128xf32>
    %22 = tpu.matmul %0, %21, %cst_16 {dimension_numbers = #tpu.dot_dimension_numbers<[1], [0], [0], [1], [0, 0, 1, 1], [], []>} : vector<256x256xbf16>, vector<256x128xbf16>, vector<256x128xf32> -> vector<256x128xf32>
    %23 = arith.truncf %22 : vector<256x128xf32> to vector<256x128xbf16>
    %c0_17 = arith.constant 0 : index
    %c0_18 = arith.constant 0 : index
    %24 = vector.load %arg6[%c0_17, %c0_18] : memref<128x128xbf16, #tpu.memory_space<vmem>>, vector<128x128xbf16>
    %cst_19 = arith.constant dense<0.000000e+00> : vector<256x128xf32>
    %25 = tpu.matmul %23, %24, %cst_19 {dimension_numbers = #tpu.dot_dimension_numbers<[1], [0], [0], [1], [0, 0, 1, 1], [], []>} : vector<256x128xbf16>, vector<128x128xbf16>, vector<256x128xf32> -> vector<256x128xf32>
    %c0_20 = arith.constant 0 : index
    %c0_21 = arith.constant 0 : index
    %26 = vector.load %arg7[%c0_20, %c0_21] : memref<1x128xf32, #tpu.memory_space<vmem>>, vector<1x128xf32>
    %27 = vector.broadcast %26 : vector<1x128xf32> to vector<256x128xf32>
    %28 = arith.addf %25, %27 : vector<256x128xf32>
    %29 = arith.truncf %28 : vector<256x128xf32> to vector<256x128xbf16>
    %c0_22 = arith.constant 0 : index
    %c0_23 = arith.constant 0 : index
    %30 = vector.load %arg8[%c0_22, %c0_23] : memref<32x256xbf16, #tpu.memory_space<vmem>>, vector<32x256xbf16>
    %cst_24 = arith.constant dense<0.000000e+00> : vector<32x128xf32>
    %31 = tpu.matmul %30, %29, %cst_24 {dimension_numbers = #tpu.dot_dimension_numbers<[1], [0], [0], [1], [0, 0, 1, 1], [], []>} : vector<32x256xbf16>, vector<256x128xbf16>, vector<32x128xf32> -> vector<32x128xf32>
    %32 = arith.truncf %31 : vector<32x128xf32> to vector<32x128xbf16>
    %c0_25 = arith.constant 0 : index
    %c0_26 = arith.constant 0 : index
    %33 = vector.load %arg9[%c0_25, %c0_26] : memref<128x128xbf16, #tpu.memory_space<vmem>>, vector<128x128xbf16>
    %cst_27 = arith.constant dense<0.000000e+00> : vector<32x128xf32>
    %34 = tpu.matmul %32, %33, %cst_27 {dimension_numbers = #tpu.dot_dimension_numbers<[1], [0], [0], [1], [0, 0, 1, 1], [], []>} : vector<32x128xbf16>, vector<128x128xbf16>, vector<32x128xf32> -> vector<32x128xf32>
    %c0_28 = arith.constant 0 : index
    %c0_29 = arith.constant 0 : index
    %35 = vector.load %arg10[%c0_28, %c0_29] : memref<1x128xf32, #tpu.memory_space<vmem>>, vector<1x128xf32>
    %36 = vector.broadcast %35 : vector<1x128xf32> to vector<32x128xf32>
    %37 = arith.addf %34, %36 : vector<32x128xf32>
    %c0_30 = arith.constant 0 : index
    %c0_31 = arith.constant 0 : index
    %38 = vector.load %arg11[%c0_30, %c0_31] : memref<32x128xf32, #tpu.memory_space<vmem>>, vector<32x128xf32>
    tpu.vector_store %arg11[%c0_30, %c0_31], %37 {strides = array<i32>} : memref<32x128xf32, #tpu.memory_space<vmem>>, vector<32x128xf32>,
    return
  }
}

</mosaic_0001>

<llo_original>
// kernel: tpu_custom_call.1
$region0: #{tpu_custom_call.1}
  #allocation0 [shape = 'u32[]', space=smem, size = 0x4, offset = 0x4, fixed_abs, tag = 'smem constant byte address 0x4 - core index']
  #allocation1 [shape = 'u32[144,128]{1,0:T(1,128)}', space=vmem, size = 0x12000, scoped, tag = 'internal scratch']
  %s0 = inlined_call_operand.hbm [shape: bf16[256,256], index: 0, kind: input, shape index: {}]
  %s1 = inlined_call_operand.hbm [shape: bf16[256,128], index: 1, kind: input, shape index: {}]
  %s2 = inlined_call_operand.hbm [shape: bf16[128,128], index: 2, kind: input, shape index: {}]
  %s3 = inlined_call_operand.vmem [shape: f32[1,128], index: 3, kind: input, shape index: {}]
  %s4 = inlined_call_operand.hbm [shape: bf16[128,128], index: 4, kind: input, shape index: {}]
  %s5 = inlined_call_operand.vmem [shape: f32[1,128], index: 5, kind: input, shape index: {}]
  %s6 = inlined_call_operand.hbm [shape: bf16[128,128], index: 6, kind: input, shape index: {}]
  %s7 = inlined_call_operand.vmem [shape: f32[1,128], index: 7, kind: input, shape index: {}]
  %s8 = inlined_call_operand.hbm [shape: bf16[32,256], index: 8, kind: input, shape index: {}]
  %s9 = inlined_call_operand.hbm [shape: bf16[128,128], index: 9, kind: input, shape index: {}]
  %s10 = inlined_call_operand.vmem [shape: f32[1,128], index: 10, kind: input, shape index: {}]
  %s11 = inlined_call_operand.hbm [shape: f32[32,128], index: 11, kind: output, shape index: {}]
  %s12 = sld [smem:[#allocation0]]
  $region82: #{tpu_custom_call.1} parent=0
    _
  %s14 = ssub.s32 1, %s12
  %s15 = scalar_select 0, %s14, %s12
  $region1: #{tpu_custom_call.1} parent=0
    #allocation2 [shape = 'u8[131072]{0}', space=vmem, size = 0x20000, scoped, tag = 'input window, operand 0, single buffered']
    #allocation3 [shape = 's32[1]{0}', space=sflag, size = 0x4, scoped, tag = 'scoped memory for tpu_custom_call.1']
    #allocation4 [shape = 's32[1]{0}', space=sflag, size = 0x4, scoped, tag = 'scoped memory for tpu_custom_call.1']
    #allocation5 [shape = 'u8[65536]{0}', space=vmem, size = 0x10000, scoped, tag = 'input window, operand 1, single buffered']
    #allocation6 [shape = 's32[1]{0}', space=sflag, size = 0x4, scoped, tag = 'scoped memory for tpu_custom_call.1']
    #allocation7 [shape = 'u8[32768]{0}', space=vmem, size = 0x8000, scoped, tag = 'input window, operand 2, single buffered']
    #allocation8 [shape = 'u8[32768]{0}', space=vmem, size = 0x8000, scoped, tag = 'input window, operand 4, single buffered']
    #allocation9 [shape = 's32[1]{0}', space=sflag, size = 0x4, scoped, tag = 'scoped memory for tpu_custom_call.1']
    #allocation10 [shape = 'u8[32768]{0}', space=vmem, size = 0x8000, scoped, tag = 'input window, operand 6, single buffered']
    #allocation11 [shape = 'u8[16384]{0}', space=vmem, size = 0x4000, scoped, tag = 'input window, operand 8, single buffered']
    #allocation12 [shape = 's32[1]{0}', space=sflag, size = 0x4, scoped, tag = 'scoped memory for tpu_custom_call.1']
    #allocation13 [shape = 'u8[32768]{0}', space=vmem, size = 0x8000, scoped, tag = 'input window, operand 9, single buffered']
    #allocation14 [shape = 'u8[16384]{0}', space=vmem, size = 0x4000, scoped, tag = 'output window, operand 0, single buffered']
    %16 = vsyncpa [#allocation3], 0
    %17 = vsyncpa [#allocation6], 0
    %18 = vsyncpa [#allocation9], 0
    %19 = vsyncpa [#allocation12], 0
    %20 = vsyncpa [#allocation4], 0
    // Predicated region
    $region2: #{tpu_custom_call.1} parent=1 // pred_check
      _
    $region3: #{tpu_custom_call.1} parent=1 // pred_check_branch
      %22 = sbr.rel (0) target = $region5
    $region4: #{tpu_custom_call.1} parent=1 // pred_region
      %s24 = ssub.s32 4096, 4096
      %25 = vsyncadd [#allocation3], %s24
      %s26 = sshll.u32 [#allocation2], 4
      %s27 = int_to_ptr.vmem [resolvable:$true] %s26
      %32 = dma.hbm_to_vmem [thread:$0]  %s0, 4096, %s27, [#allocation3], 128, 128, 8
    $region5: #{tpu_custom_call.1} parent=1 // pred_fallthru
      _
    // Predicated region
    $region6: #{tpu_custom_call.1} parent=1 // pred_check
      _
    $region7: #{tpu_custom_call.1} parent=1 // pred_check_branch
      %34 = sbr.rel (0) target = $region9
    $region8: #{tpu_custom_call.1} parent=1 // pred_region
      %s36 = ssub.s32 2048, 2048
      %37 = vsyncadd [#allocation6], %s36
      %s38 = sshll.u32 [#allocation5], 4
      %s39 = int_to_ptr.vmem [resolvable:$true] %s38
      %44 = dma.hbm_to_vmem [thread:$0]  %s1, 2048, %s39, [#allocation6], 64, 64, 4
    $region9: #{tpu_custom_call.1} parent=1 // pred_fallthru
      _
    // Predicated region
    $region10: #{tpu_custom_call.1} parent=1 // pred_check
      _
    $region11: #{tpu_custom_call.1} parent=1 // pred_check_branch
      %46 = sbr.rel (0) target = $region13
    $region12: #{tpu_custom_call.1} parent=1 // pred_region
      %s48 = ssub.s32 1024, 1024
      %49 = vsyncadd [#allocation6], %s48
      %s50 = sshll.u32 [#allocation7], 4
      %s51 = int_to_ptr.vmem [resolvable:$true] %s50
      %56 = dma.hbm_to_vmem [thread:$0]  %s2, 1024, %s51, [#allocation6], 64, 64, 4
    $region13: #{tpu_custom_call.1} parent=1 // pred_fallthru
      _
    // Predicated region
    $region14: #{tpu_custom_call.1} parent=1 // pred_check
      _
    $region15: #{tpu_custom_call.1} parent=1 // pred_check_branch
      %58 = sbr.rel (0) target = $region17
    $region16: #{tpu_custom_call.1} parent=1 // pred_region
      _
    $region17: #{tpu_custom_call.1} parent=1 // pred_fallthru
      _
    // Predicated region
    $region18: #{tpu_custom_call.1} parent=1 // pred_check
      _
    $region19: #{tpu_custom_call.1} parent=1 // pred_check_branch
      %60 = sbr.rel (0) target = $region21
    $region20: #{tpu_custom_call.1} parent=1 // pred_region
      %s62 = ssub.s32 1024, 1024
      %63 = vsyncadd [#allocation9], %s62
      %s64 = sshll.u32 [#allocation8], 4
      %s65 = int_to_ptr.vmem [resolvable:$true] %s64
      %70 = dma.hbm_to_vmem [thread:$0]  %s4, 1024, %s65, [#allocation9], 64, 64, 4
    $region21: #{tpu_custom_call.1} parent=1 // pred_fallthru
      _
    // Predicated region
    $region22: #{tpu_custom_call.1} parent=1 // pred_check
      _
    $region23: #{tpu_custom_call.1} parent=1 // pred_check_branch
      %72 = sbr.rel (0) target = $region25
    $region24: #{tpu_custom_call.1} parent=1 // pred_region
      _
    $region25: #{tpu_custom_call.1} parent=1 // pred_fallthru
      _
    // Predicated region
    $region26: #{tpu_custom_call.1} parent=1 // pred_check
      _
    $region27: #{tpu_custom_call.1} parent=1 // pred_check_branch
      %74 = sbr.rel (0) target = $region29
    $region28: #{tpu_custom_call.1} parent=1 // pred_region
      %s76 = ssub.s32 1024, 1024
      %77 = vsyncadd [#allocation9], %s76
      %s78 = sshll.u32 [#allocation10], 4
      %s79 = int_to_ptr.vmem [resolvable:$true] %s78
      %84 = dma.hbm_to_vmem [thread:$0]  %s6, 1024, %s79, [#allocation9], 64, 64, 4
    $region29: #{tpu_custom_call.1} parent=1 // pred_fallthru
      _
    // Predicated region
    $region30: #{tpu_custom_call.1} parent=1 // pred_check
      _
    $region31: #{tpu_custom_call.1} parent=1 // pred_check_branch
      %86 = sbr.rel (0) target = $region33
    $region32: #{tpu_custom_call.1} parent=1 // pred_region
      _
    $region33: #{tpu_custom_call.1} parent=1 // pred_fallthru
      _
    // Predicated region
    $region34: #{tpu_custom_call.1} parent=1 // pred_check
      _
    $region35: #{tpu_custom_call.1} parent=1 // pred_check_branch
      %88 = sbr.rel (0) target = $region37
    $region36: #{tpu_custom_call.1} parent=1 // pred_region
      %s90 = ssub.s32 512, 512
      %91 = vsyncadd [#allocation12], %s90
      %s92 = sshll.u32 [#allocation11], 4
      %s93 = int_to_ptr.vmem [resolvable:$true] %s92
      %98 = dma.hbm_to_vmem [thread:$0]  %s8, 512, %s93, [#allocation12], 128, 128, 8
    $region37: #{tpu_custom_call.1} parent=1 // pred_fallthru
      _
    // Predicated region
    $region38: #{tpu_custom_call.1} parent=1 // pred_check
      _
    $region39: #{tpu_custom_call.1} parent=1 // pred_check_branch
      %100 = sbr.rel (0) target = $region41
    $region40: #{tpu_custom_call.1} parent=1 // pred_region
      %s102 = ssub.s32 1024, 1024
      %103 = vsyncadd [#allocation12], %s102
      %s104 = sshll.u32 [#allocation13], 4
      %s105 = int_to_ptr.vmem [resolvable:$true] %s104
      %110 = dma.hbm_to_vmem [thread:$0]  %s9, 1024, %s105, [#allocation12], 64, 64, 4
    $region41: #{tpu_custom_call.1} parent=1 // pred_fallthru
      _
    // Predicated region
    $region42: #{tpu_custom_call.1} parent=1 // pred_check
      _
    $region43: #{tpu_custom_call.1} parent=1 // pred_check_branch
      %112 = sbr.rel (0) target = $region45
    $region44: #{tpu_custom_call.1} parent=1 // pred_region
      _
    $region45: #{tpu_custom_call.1} parent=1 // pred_fallthru
      _
    // Predicated region
    $region46: #{tpu_custom_call.1} parent=1 // pred_check
      _
    $region47: #{tpu_custom_call.1} parent=1 // pred_check_branch
      %114 = sbr.rel (0) target = $region49
    $region48: #{tpu_custom_call.1} parent=1 // pred_region
      %115 = dma.done [#allocation3], 4096
    $region49: #{tpu_custom_call.1} parent=1 // pred_fallthru
      _
    // Predicated region
    $region50: #{tpu_custom_call.1} parent=1 // pred_check
      _
    $region51: #{tpu_custom_call.1} parent=1 // pred_check_branch
      %117 = sbr.rel (0) target = $region53
    $region52: #{tpu_custom_call.1} parent=1 // pred_region
      %118 = dma.done [#allocation6], 2048
    $region53: #{tpu_custom_call.1} parent=1 // pred_fallthru
      _
    // Predicated region
    $region54: #{tpu_custom_call.1} parent=1 // pred_check
      _
    $region55: #{tpu_custom_call.1} parent=1 // pred_check_branch
      %120 = sbr.rel (0) target = $region57
    $region56: #{tpu_custom_call.1} parent=1 // pred_region
      %121 = dma.done [#allocation6], 1024
    $region57: #{tpu_custom_call.1} parent=1 // pred_fallthru
      _
    // Predicated region
    $region58: #{tpu_custom_call.1} parent=1 // pred_check
      _
    $region59: #{tpu_custom_call.1} parent=1 // pred_check_branch
      %123 = sbr.rel (0) target = $region61
    $region60: #{tpu_custom_call.1} parent=1 // pred_region
      %124 = dma.done [#allocation9], 1024
    $region61: #{tpu_custom_call.1} parent=1 // pred_fallthru
      _
    // Predicated region
    $region62: #{tpu_custom_call.1} parent=1 // pred_check
      _
    $region63: #{tpu_custom_call.1} parent=1 // pred_check_branch
      %126 = sbr.rel (0) target = $region65
    $region64: #{tpu_custom_call.1} parent=1 // pred_region
      %127 = dma.done [#allocation9], 1024
    $region65: #{tpu_custom_call.1} parent=1 // pred_fallthru
      _
    // Predicated region
    $region66: #{tpu_custom_call.1} parent=1 // pred_check
      _
    $region67: #{tpu_custom_call.1} parent=1 // pred_check_branch
      %129 = sbr.rel (0) target = $region69
    $region68: #{tpu_custom_call.1} parent=1 // pred_region
      %130 = dma.done [#allocation12], 512
    $region69: #{tpu_custom_call.1} parent=1 // pred_fallthru
      _
    // Predicated region
    $region70: #{tpu_custom_call.1} parent=1 // pred_check
      _
    $region71: #{tpu_custom_call.1} parent=1 // pred_check_branch
      %132 = sbr.rel (0) target = $region73
    $region72: #{tpu_custom_call.1} parent=1 // pred_region
      %133 = dma.done [#allocation12], 1024
    $region73: #{tpu_custom_call.1} parent=1 // pred_fallthru
      _
    %v135 = vld [vmem:[#allocation2] sm:$0xff]
    %v136 = vld [vmem:[#allocation2 + $0x8] sm:$0xff]
    %v137 = vld [vmem:[#allocation2 + $0x10] sm:$0xff]
    %v138 = vld [vmem:[#allocation2 + $0x18] sm:$0xff]
    %v139 = vld [vmem:[#allocation2 + $0x20] sm:$0xff]
    %v140 = vld [vmem:[#allocation2 + $0x28] sm:$0xff]
    %v141 = vld [vmem:[#allocation2 + $0x30] sm:$0xff]
    %v142 = vld [vmem:[#allocation2 + $0x38] sm:$0xff]
    %v143 = vld [vmem:[#allocation2 + $0x40] sm:$0xff]
    %v144 = vld [vmem:[#allocation2 + $0x48] sm:$0xff]
    %v145 = vld [vmem:[#allocation2 + $0x50] sm:$0xff]
    %v146 = vld [vmem:[#allocation2 + $0x58] sm:$0xff]
    %v147 = vld [vmem:[#allocation2 + $0x60] sm:$0xff]
    %v148 = vld [vmem:[#allocation2 + $0x68] sm:$0xff]
    %v149 = vld [vmem:[#allocation2 + $0x70] sm:$0xff]
    %v150 = vld [vmem:[#allocation2 + $0x78] sm:$0xff]
    %v151 = vld [vmem:[#allocation2 + $0x80] sm:$0xff]
    %v152 = vld [vmem:[#allocation2 + $0x88] sm:$0xff]
    %v153 = vld [vmem:[#allocation2 + $0x90] sm:$0xff]
    %v154 = vld [vmem:[#allocation2 + $0x98] sm:$0xff]
    %v155 = vld [vmem:[#allocation2 + $0xa0] sm:$0xff]
    %v156 = vld [vmem:[#allocation2 + $0xa8] sm:$0xff]
    %v157 = vld [vmem:[#allocation2 + $0xb0] sm:$0xff]
    %v158 = vld [vmem:[#allocation2 + $0xb8] sm:$0xff]
    %v159 = vld [vmem:[#allocation2 + $0xc0] sm:$0xff]
    %v160 = vld [vmem:[#allocation2 + $0xc8] sm:$0xff]
    %v161 = vld [vmem:[#allocation2 + $0xd0] sm:$0xff]
    %v162 = vld [vmem:[#allocation2 + $0xd8] sm:$0xff]
    %v163 = vld [vmem:[#allocation2 + $0xe0] sm:$0xff]
    %v164 = vld [vmem:[#allocation2 + $0xe8] sm:$0xff]
    %v165 = vld [vmem:[#allocation2 + $0xf0] sm:$0xff]
    %v166 = vld [vmem:[#allocation2 + $0xf8] sm:$0xff]
    %v167 = vld [vmem:[#allocation5] sm:$0xf]
    %v168 = vld [vmem:[#allocation5 + $0x4] sm:$0xf]
    %v169 = vld [vmem:[#allocation5 + $0x8] sm:$0xf]
    %v170 = vld [vmem:[#allocation5 + $0xc] sm:$0xf]
    %v171 = vld [vmem:[#allocation5 + $0x10] sm:$0xf]
    %v172 = vld [vmem:[#allocation5 + $0x14] sm:$0xf]
    %v173 = vld [vmem:[#allocation5 + $0x18] sm:$0xf]
    %v174 = vld [vmem:[#allocation5 + $0x1c] sm:$0xf]
    %v175 = vld [vmem:[#allocation5 + $0x20] sm:$0xf]
    %v176 = vld [vmem:[#allocation5 + $0x24] sm:$0xf]
    %v177 = vld [vmem:[#allocation5 + $0x28] sm:$0xf]
    %v178 = vld [vmem:[#allocation5 + $0x2c] sm:$0xf]
    %v179 = vld [vmem:[#allocation5 + $0x30] sm:$0xf]
    %v180 = vld [vmem:[#allocation5 + $0x34] sm:$0xf]
    %v181 = vld [vmem:[#allocation5 + $0x38] sm:$0xf]
    %v182 = vld [vmem:[#allocation5 + $0x3c] sm:$0xf]
    %v183 = vld [vmem:[#allocation5 + $0x40] sm:$0xf]
    %v184 = vld [vmem:[#allocation5 + $0x44] sm:$0xf]
    %v185 = vld [vmem:[#allocation5 + $0x48] sm:$0xf]
    %v186 = vld [vmem:[#allocation5 + $0x4c] sm:$0xf]
    %v187 = vld [vmem:[#allocation5 + $0x50] sm:$0xf]
    %v188 = vld [vmem:[#allocation5 + $0x54] sm:$0xf]
    %v189 = vld [vmem:[#allocation5 + $0x58] sm:$0xf]
    %v190 = vld [vmem:[#allocation5 + $0x5c] sm:$0xf]
    %v191 = vld [vmem:[#allocation5 + $0x60] sm:$0xf]
    %v192 = vld [vmem:[#allocation5 + $0x64] sm:$0xf]
    %v193 = vld [vmem:[#allocation5 + $0x68] sm:$0xf]
    %v194 = vld [vmem:[#allocation5 + $0x6c] sm:$0xf]
    %v195 = vld [vmem:[#allocation5 + $0x70] sm:$0xf]
    %v196 = vld [vmem:[#allocation5 + $0x74] sm:$0xf]
    %v197 = vld [vmem:[#allocation5 + $0x78] sm:$0xf]
    %v198 = vld [vmem:[#allocation5 + $0x7c] sm:$0xf]
    %v231 = vunpack.c.l.b16 %v135
    %v232 = vunpack.c.h.b16 %v135
    %v233 = vunpack.c.l.b16 %v136
    %v234 = vunpack.c.h.b16 %v136
    %v235 = vunpack.c.l.b16 %v137
    %v236 = vunpack.c.h.b16 %v137
    %v237 = vunpack.c.l.b16 %v138
    %v238 = vunpack.c.h.b16 %v138
    %v239 = vunpack.c.l.b16 %v139
    %v240 = vunpack.c.h.b16 %v139
    %v241 = vunpack.c.l.b16 %v140
    %v242 = vunpack.c.h.b16 %v140
    %v243 = vunpack.c.l.b16 %v141
    %v244 = vunpack.c.h.b16 %v141
    %v245 = vunpack.c.l.b16 %v142
    %v246 = vunpack.c.h.b16 %v142
    %v247 = vunpack.c.l.b16 %v143
    %v248 = vunpack.c.h.b16 %v143
    %v249 = vunpack.c.l.b16 %v144
    %v250 = vunpack.c.h.b16 %v144
    %v251 = vunpack.c.l.b16 %v145
    %v252 = vunpack.c.h.b16 %v145
    %v253 = vunpack.c.l.b16 %v146
    %v254 = vunpack.c.h.b16 %v146
    %v255 = vunpack.c.l.b16 %v147
    %v256 = vunpack.c.h.b16 %v147
    %v257 = vunpack.c.l.b16 %v148
    %v258 = vunpack.c.h.b16 %v148
    %v259 = vunpack.c.l.b16 %v149
    %v260 = vunpack.c.h.b16 %v149
    %v261 = vunpack.c.l.b16 %v150
    %v262 = vunpack.c.h.b16 %v150
    %v263 = vunpack.c.l.b16 %v151
    %v264 = vunpack.c.h.b16 %v151
    %v265 = vunpack.c.l.b16 %v152
    %v266 = vunpack.c.h.b16 %v152
    %v267 = vunpack.c.l.b16 %v153
    %v268 = vunpack.c.h.b16 %v153
    %v269 = vunpack.c.l.b16 %v154
    %v270 = vunpack.c.h.b16 %v154
    %v271 = vunpack.c.l.b16 %v155
    %v272 = vunpack.c.h.b16 %v155
    %v273 = vunpack.c.l.b16 %v156
    %v274 = vunpack.c.h.b16 %v156
    %v275 = vunpack.c.l.b16 %v157
    %v276 = vunpack.c.h.b16 %v157
    %v277 = vunpack.c.l.b16 %v158
    %v278 = vunpack.c.h.b16 %v158
    %v279 = vunpack.c.l.b16 %v159
    %v280 = vunpack.c.h.b16 %v159
    %v281 = vunpack.c.l.b16 %v160
    %v282 = vunpack.c.h.b16 %v160
    %v283 = vunpack.c.l.b16 %v161
    %v284 = vunpack.c.h.b16 %v161
    %v285 = vunpack.c.l.b16 %v162
    %v286 = vunpack.c.h.b16 %v162
    %v287 = vunpack.c.l.b16 %v163
    %v288 = vunpack.c.h.b16 %v163
    %v289 = vunpack.c.l.b16 %v164
    %v290 = vunpack.c.h.b16 %v164
    %v291 = vunpack.c.l.b16 %v165
    %v292 = vunpack.c.h.b16 %v165
    %v293 = vunpack.c.l.b16 %v166
    %v294 = vunpack.c.h.b16 %v166
    %v295 = vpack.c.b16 %v233, %v231
    %v296 = vpack.c.b16 %v234, %v232
    %v297 = vpack.c.b16 %v237, %v235
    %v298 = vpack.c.b16 %v238, %v236
    %v299 = vpack.c.b16 %v241, %v239
    %v300 = vpack.c.b16 %v242, %v240
    %v301 = vpack.c.b16 %v245, %v243
    %v302 = vpack.c.b16 %v246, %v244
    %v303 = vpack.c.b16 %v249, %v247
    %v304 = vpack.c.b16 %v250, %v248
    %v305 = vpack.c.b16 %v253, %v251
    %v306 = vpack.c.b16 %v254, %v252
    %v307 = vpack.c.b16 %v257, %v255
    %v308 = vpack.c.b16 %v258, %v256
    %v309 = vpack.c.b16 %v261, %v259
    %v310 = vpack.c.b16 %v262, %v260
    %v311 = vpack.c.b16 %v265, %v263
    %v312 = vpack.c.b16 %v266, %v264
    %v313 = vpack.c.b16 %v269, %v267
    %v314 = vpack.c.b16 %v270, %v268
    %v315 = vpack.c.b16 %v273, %v271
    %v316 = vpack.c.b16 %v274, %v272
    %v317 = vpack.c.b16 %v277, %v275
    %v318 = vpack.c.b16 %v278, %v276
    %v319 = vpack.c.b16 %v281, %v279
    %v320 = vpack.c.b16 %v282, %v280
    %v321 = vpack.c.b16 %v285, %v283
    %v322 = vpack.c.b16 %v286, %v284
    %v323 = vpack.c.b16 %v289, %v287
    %v324 = vpack.c.b16 %v290, %v288
    %v325 = vpack.c.b16 %v293, %v291
    %v326 = vpack.c.b16 %v294, %v292
    %v391 = vunpack.c.l.b16 %v167
    %v392 = vunpack.c.l.b16 %v168
    %v393 = vunpack.c.l.b16 %v169
    %v394 = vunpack.c.l.b16 %v170
    %v395 = vunpack.c.l.b16 %v171
    %v396 = vunpack.c.l.b16 %v172
    %v397 = vunpack.c.l.b16 %v173
    %v398 = vunpack.c.l.b16 %v174
    %v399 = vunpack.c.l.b16 %v175
    %v400 = vunpack.c.l.b16 %v176
    %v401 = vunpack.c.l.b16 %v177
    %v402 = vunpack.c.l.b16 %v178
    %v403 = vunpack.c.l.b16 %v179
    %v404 = vunpack.c.l.b16 %v180
    %v405 = vunpack.c.l.b16 %v181
    %v406 = vunpack.c.l.b16 %v182
    %v407 = vunpack.c.l.b16 %v183
    %v408 = vunpack.c.l.b16 %v184
    %v409 = vunpack.c.l.b16 %v185
    %v410 = vunpack.c.l.b16 %v186
    %v411 = vunpack.c.l.b16 %v187
    %v412 = vunpack.c.l.b16 %v188
    %v413 = vunpack.c.l.b16 %v189
    %v414 = vunpack.c.l.b16 %v190
    %v415 = vunpack.c.l.b16 %v191
    %v416 = vunpack.c.l.b16 %v192
    %v417 = vunpack.c.l.b16 %v193
    %v418 = vunpack.c.l.b16 %v194
    %v419 = vunpack.c.l.b16 %v195
    %v420 = vunpack.c.l.b16 %v196
    %v421 = vunpack.c.l.b16 %v197
    %v422 = vunpack.c.l.b16 %v198
    %v423 = vpack.c.b16 %v392, %v391
    %v424 = vpack.c.b16 %v394, %v393
    %v425 = vpack.c.b16 %v396, %v395
    %v426 = vpack.c.b16 %v398, %v397
    %v427 = vpack.c.b16 %v400, %v399
    %v428 = vpack.c.b16 %v402, %v401
    %v429 = vpack.c.b16 %v404, %v403
    %v430 = vpack.c.b16 %v406, %v405
    %v431 = vpack.c.b16 %v408, %v407
    %v432 = vpack.c.b16 %v410, %v409
    %v433 = vpack.c.b16 %v412, %v411
    %v434 = vpack.c.b16 %v414, %v413
    %v435 = vpack.c.b16 %v416, %v415
    %v436 = vpack.c.b16 %v418, %v417
    %v437 = vpack.c.b16 %v420, %v419
    %v438 = vpack.c.b16 %v422, %v421
    %455 = vmatprep.subr.bf16.mxu0 0
    %456 = vmatpush1.bf16.msra.mxu0 %v430
    %457 = vmatprep.subr.bf16.mxu0 0
    %458 = vmatpush1.bf16.msra.mxu0 %v429
    %459 = vmatprep.subr.bf16.mxu0 0
    %460 = vmatpush1.bf16.msra.mxu0 %v428
    %461 = vmatprep.subr.bf16.mxu0 0
    %462 = vmatpush1.bf16.msra.mxu0 %v427
    %463 = vmatprep.subr.bf16.mxu0 0
    %464 = vmatpush1.bf16.msra.mxu0 %v426
    %465 = vmatprep.subr.bf16.mxu0 0
    %466 = vmatpush1.bf16.msra.mxu0 %v425
    %467 = vmatprep.subr.bf16.mxu0 0
    %468 = vmatpush1.bf16.msra.mxu0 %v424
    %469 = vmatprep.subr.bf16.mxu0 0
    %470 = vmatpush1.bf16.msra.mxu0 %v423
    %471 = vmatprep.subr.bf16.mxu0 0
    %472 = vmatpush2.bf16.msra.mxu0 %v438
    %473 = vmatprep.subr.bf16.mxu0 0
    %474 = vmatpush2.bf16.msra.mxu0 %v437
    %475 = vmatprep.subr.bf16.mxu0 0
    %476 = vmatpush2.bf16.msra.mxu0 %v436
    %477 = vmatprep.subr.bf16.mxu0 0
    %478 = vmatpush2.bf16.msra.mxu0 %v435
    %479 = vmatprep.subr.bf16.mxu0 0
    %480 = vmatpush2.bf16.msra.mxu0 %v434
    %481 = vmatprep.subr.bf16.mxu0 0
    %482 = vmatpush2.bf16.msra.mxu0 %v433
    %483 = vmatprep.subr.bf16.mxu0 0
    %484 = vmatpush2.bf16.msra.mxu0 %v432
    %485 = vmatprep.subr.bf16.mxu0 0
    %486 = vmatpush2.bf16.msra.mxu0 %v431
    %487 = vmatprep.mubr.bf16.mxu0 %v296
    %488 = vmatmul.mubr.bf16.gmra.mxu0 %v295
    %v489 = vpop.f32.mrf.mxu0
    %v490 = vadd.f32 0.0, %v489
    %v491 = vpop.f32.mrf.mxu0
    %v492 = vpop.f32.mrf.mxu0
    %v493 = vadd.f32 0.0, %v492
    %v494 = vpop.f32.mrf.mxu0
    %495 = vmatprep.mubr.bf16.mxu0 %v298
    %496 = vmatmul.mubr.bf16.gmra.mxu0 %v297
    %v497 = vpop.f32.mrf.mxu0
    %v498 = vadd.f32 0.0, %v497
    %v499 = vpop.f32.mrf.mxu0
    %v500 = vpop.f32.mrf.mxu0
    %v501 = vadd.f32 0.0, %v500
    %v502 = vpop.f32.mrf.mxu0
    %503 = vmatprep.mubr.bf16.mxu0 %v300
    %504 = vmatmul.mubr.bf16.gmra.mxu0 %v299
    %v505 = vpop.f32.mrf.mxu0
    %v506 = vadd.f32 0.0, %v505
    %v507 = vpop.f32.mrf.mxu0
    %v508 = vpop.f32.mrf.mxu0
    %v509 = vadd.f32 0.0, %v508
    %v510 = vpop.f32.mrf.mxu0
    %511 = vmatprep.mubr.bf16.mxu0 %v302
    %512 = vmatmul.mubr.bf16.gmra.mxu0 %v301
    %v513 = vpop.f32.mrf.mxu0
    %v514 = vadd.f32 0.0, %v513
    %v515 = vpop.f32.mrf.mxu0
    %v516 = vpop.f32.mrf.mxu0
    %v517 = vadd.f32 0.0, %v516
    %v518 = vpop.f32.mrf.mxu0
    %519 = vmatprep.mubr.bf16.mxu0 %v304
    %520 = vmatmul.mubr.bf16.gmra.mxu0 %v303
    %v521 = vpop.f32.mrf.mxu0
    %v522 = vadd.f32 0.0, %v521
    %v523 = vpop.f32.mrf.mxu0
    %v524 = vpop.f32.mrf.mxu0
    %v525 = vadd.f32 0.0, %v524
    %v526 = vpop.f32.mrf.mxu0
    %527 = vmatprep.mubr.bf16.mxu0 %v306
    %528 = vmatmul.mubr.bf16.gmra.mxu0 %v305
    %v529 = vpop.f32.mrf.mxu0
    %v530 = vadd.f32 0.0, %v529
    %v531 = vpop.f32.mrf.mxu0
    %v532 = vpop.f32.mrf.mxu0
    %v533 = vadd.f32 0.0, %v532
    %v534 = vpop.f32.mrf.mxu0
    %535 = vmatprep.mubr.bf16.mxu0 %v308
    %536 = vmatmul.mubr.bf16.gmra.mxu0 %v307
    %v537 = vpop.f32.mrf.mxu0
    %v538 = vadd.f32 0.0, %v537
    %v539 = vpop.f32.mrf.mxu0
    %v540 = vpop.f32.mrf.mxu0
    %v541 = vadd.f32 0.0, %v540
    %v542 = vpop.f32.mrf.mxu0
    %543 = vmatprep.mubr.bf16.mxu0 %v310
    %544 = vmatmul.mubr.bf16.gmra.mxu0 %v309
    %v545 = vpop.f32.mrf.mxu0
    %v546 = vadd.f32 0.0, %v545
    %v547 = vpop.f32.mrf.mxu0
    %v548 = vpop.f32.mrf.mxu0
    %v549 = vadd.f32 0.0, %v548
    %v550 = vpop.f32.mrf.mxu0
    %551 = vmatprep.mubr.bf16.mxu0 %v312
    %552 = vmatmul.mubr.bf16.gmra.mxu0 %v311
    %v553 = vpop.f32.mrf.mxu0
    %v554 = vadd.f32 0.0, %v553
    %v555 = vpop.f32.mrf.mxu0
    %v556 = vpop.f32.mrf.mxu0
    %v557 = vadd.f32 0.0, %v556
    %v558 = vpop.f32.mrf.mxu0
    %559 = vmatprep.mubr.bf16.mxu0 %v314
    %560 = vmatmul.mubr.bf16.gmra.mxu0 %v313
    %v561 = vpop.f32.mrf.mxu0
    %v562 = vadd.f32 0.0, %v561
    %v563 = vpop.f32.mrf.mxu0
    %v564 = vpop.f32.mrf.mxu0
    %v565 = vadd.f32 0.0, %v564
    %v566 = vpop.f32.mrf.mxu0
    %567 = vmatprep.mubr.bf16.mxu0 %v316
    %568 = vmatmul.mubr.bf16.gmra.mxu0 %v315
    %v569 = vpop.f32.mrf.mxu0
    %v570 = vadd.f32 0.0, %v569
    %v571 = vpop.f32.mrf.mxu0
    %v572 = vpop.f32.mrf.mxu0
    %v573 = vadd.f32 0.0, %v572
    %v574 = vpop.f32.mrf.mxu0
    %575 = vmatprep.mubr.bf16.mxu0 %v318
    %576 = vmatmul.mubr.bf16.gmra.mxu0 %v317
    %v577 = vpop.f32.mrf.mxu0
    %v578 = vadd.f32 0.0, %v577
    %v579 = vpop.f32.mrf.mxu0
    %v580 = vpop.f32.mrf.mxu0
    %v581 = vadd.f32 0.0, %v580
    %v582 = vpop.f32.mrf.mxu0
    %583 = vmatprep.mubr.bf16.mxu0 %v320
    %584 = vmatmul.mubr.bf16.gmra.mxu0 %v319
    %v585 = vpop.f32.mrf.mxu0
    %v586 = vadd.f32 0.0, %v585
    %v587 = vpop.f32.mrf.mxu0
    %v588 = vpop.f32.mrf.mxu0
    %v589 = vadd.f32 0.0, %v588
    %v590 = vpop.f32.mrf.mxu0
    %591 = vmatprep.mubr.bf16.mxu0 %v322
    %592 = vmatmul.mubr.bf16.gmra.mxu0 %v321
    %v593 = vpop.f32.mrf.mxu0
    %v594 = vadd.f32 0.0, %v593
    %v595 = vpop.f32.mrf.mxu0
    %v596 = vpop.f32.mrf.mxu0
    %v597 = vadd.f32 0.0, %v596
    %v598 = vpop.f32.mrf.mxu0
    %599 = vmatprep.mubr.bf16.mxu0 %v324
    %600 = vmatmul.mubr.bf16.gmra.mxu0 %v323
    %v601 = vpop.f32.mrf.mxu0
    %v602 = vadd.f32 0.0, %v601
    %v603 = vpop.f32.mrf.mxu0
    %v604 = vpop.f32.mrf.mxu0
    %v605 = vadd.f32 0.0, %v604
    %v606 = vpop.f32.mrf.mxu0
    %607 = vmatprep.mubr.bf16.mxu0 %v326
    %608 = vmatmul.mubr.bf16.gmra.mxu0 %v325
    %v609 = vpop.f32.mrf.mxu0
    %v610 = vadd.f32 0.0, %v609
    %v611 = vpop.f32.mrf.mxu0
    %v612 = vpop.f32.mrf.mxu0
    %v613 = vadd.f32 0.0, %v612
    %v614 = vpop.f32.mrf.mxu0
    %615 = vdwg.mxu0
    %v616 = vpack.c.bf16 %v493, %v490
    %v617 = vpack.c.bf16 %v501, %v498
    %v618 = vpack.c.bf16 %v509, %v506
    %v619 = vpack.c.bf16 %v517, %v514
    %v620 = vpack.c.bf16 %v525, %v522
    %v621 = vpack.c.bf16 %v533, %v530
    %v622 = vpack.c.bf16 %v541, %v538
    %v623 = vpack.c.bf16 %v549, %v546
    %v624 = vpack.c.bf16 %v557, %v554
    %v625 = vpack.c.bf16 %v565, %v562
    %v626 = vpack.c.bf16 %v573, %v570
    %v627 = vpack.c.bf16 %v581, %v578
    %v628 = vpack.c.bf16 %v589, %v586
    %v629 = vpack.c.bf16 %v597, %v594
    %v630 = vpack.c.bf16 %v605, %v602
    %v631 = vpack.c.bf16 %v613, %v610
    %v632 = vld [vmem:[#allocation7] sm:$0xf]
    %v633 = vld [vmem:[#allocation7 + $0x4] sm:$0xf]
    %v634 = vld [vmem:[#allocation7 + $0x8] sm:$0xf]
    %v635 = vld [vmem:[#allocation7 + $0xc] sm:$0xf]
    %v636 = vld [vmem:[#allocation7 + $0x10] sm:$0xf]
    %v637 = vld [vmem:[#allocation7 + $0x14] sm:$0xf]
    %v638 = vld [vmem:[#allocation7 + $0x18] sm:$0xf]
    %v639 = vld [vmem:[#allocation7 + $0x1c] sm:$0xf]
    %v640 = vld [vmem:[#allocation7 + $0x20] sm:$0xf]
    %v641 = vld [vmem:[#allocation7 + $0x24] sm:$0xf]
    %v642 = vld [vmem:[#allocation7 + $0x28] sm:$0xf]
    %v643 = vld [vmem:[#allocation7 + $0x2c] sm:$0xf]
    %v644 = vld [vmem:[#allocation7 + $0x30] sm:$0xf]
    %v645 = vld [vmem:[#allocation7 + $0x34] sm:$0xf]
    %v646 = vld [vmem:[#allocation7 + $0x38] sm:$0xf]
    %v647 = vld [vmem:[#allocation7 + $0x3c] sm:$0xf]
    %v648 = vld [vmem:[%s3] sm:$0x1]
    %v650 = vlaneseq
    %v651 = vshrl.u32 %v650, 7
    %v652 = vsub.s32 0, %v651
    %v653 = vrot.slane %v648, %v652
    %v671 = vunpack.c.l.b16 %v632
    %v672 = vunpack.c.l.b16 %v633
    %v673 = vunpack.c.l.b16 %v634
    %v674 = vunpack.c.l.b16 %v635
    %v675 = vunpack.c.l.b16 %v636
    %v676 = vunpack.c.l.b16 %v637
    %v677 = vunpack.c.l.b16 %v638
    %v678 = vunpack.c.l.b16 %v639
    %v679 = vunpack.c.l.b16 %v640
    %v680 = vunpack.c.l.b16 %v641
    %v681 = vunpack.c.l.b16 %v642
    %v682 = vunpack.c.l.b16 %v643
    %v683 = vunpack.c.l.b16 %v644
    %v684 = vunpack.c.l.b16 %v645
    %v685 = vunpack.c.l.b16 %v646
    %v686 = vunpack.c.l.b16 %v647
    %v687 = vpack.c.b16 %v672, %v671
    %v688 = vpack.c.b16 %v674, %v673
    %v689 = vpack.c.b16 %v676, %v675
    %v690 = vpack.c.b16 %v678, %v677
    %v691 = vpack.c.b16 %v680, %v679
    %v692 = vpack.c.b16 %v682, %v681
    %v693 = vpack.c.b16 %v684, %v683
    %v694 = vpack.c.b16 %v686, %v685
    %703 = vmatprep.subr.bf16.mxu0 0
    %704 = vmatpush1.bf16.msra.mxu0 %v694
    %705 = vmatprep.subr.bf16.mxu0 0
    %706 = vmatpush1.bf16.msra.mxu0 %v693
    %707 = vmatprep.subr.bf16.mxu0 0
    %708 = vmatpush1.bf16.msra.mxu0 %v692
    %709 = vmatprep.subr.bf16.mxu0 0
    %710 = vmatpush1.bf16.msra.mxu0 %v691
    %711 = vmatprep.subr.bf16.mxu0 0
    %712 = vmatpush1.bf16.msra.mxu0 %v690
    %713 = vmatprep.subr.bf16.mxu0 0
    %714 = vmatpush1.bf16.msra.mxu0 %v689
    %715 = vmatprep.subr.bf16.mxu0 0
    %716 = vmatpush1.bf16.msra.mxu0 %v688
    %717 = vmatprep.subr.bf16.mxu0 0
    %718 = vmatpush1.bf16.msra.mxu0 %v687
    %719 = vmatprep.subr.bf16.mxu0 0
    %720 = vmatpush2.bf16.msra.mxu0 0
    %721 = vmatprep.subr.bf16.mxu0 0
    %722 = vmatpush2.bf16.msra.mxu0 0
    %723 = vmatprep.subr.bf16.mxu0 0
    %724 = vmatpush2.bf16.msra.mxu0 0
    %725 = vmatprep.subr.bf16.mxu0 0
    %726 = vmatpush2.bf16.msra.mxu0 0
    %727 = vmatprep.subr.bf16.mxu0 0
    %728 = vmatpush2.bf16.msra.mxu0 0
    %729 = vmatprep.subr.bf16.mxu0 0
    %730 = vmatpush2.bf16.msra.mxu0 0
    %731 = vmatprep.subr.bf16.mxu0 0
    %732 = vmatpush2.bf16.msra.mxu0 0
    %733 = vmatprep.subr.bf16.mxu0 0
    %734 = vmatpush2.bf16.msra.mxu0 0
    %735 = vmatprep.mubr.bf16.mxu0 0
    %736 = vmatmul.mubr.bf16.gmra.mxu0 %v616
    %v737 = vpop.f32.mrf.mxu0
    %v738 = vadd.f32 %v653, %v737
    %v739 = vpop.f32.mrf.mxu0
    %v740 = vpop.f32.mrf.mxu0
    %v741 = vadd.f32 %v653, %v740
    %v742 = vpop.f32.mrf.mxu0
    %743 = vmatprep.mubr.bf16.mxu0 0
    %744 = vmatmul.mubr.bf16.gmra.mxu0 %v617
    %v745 = vpop.f32.mrf.mxu0
    %v746 = vadd.f32 %v653, %v745
    %v747 = vpop.f32.mrf.mxu0
    %v748 = vpop.f32.mrf.mxu0
    %v749 = vadd.f32 %v653, %v748
    %v750 = vpop.f32.mrf.mxu0
    %751 = vmatprep.mubr.bf16.mxu0 0
    %752 = vmatmul.mubr.bf16.gmra.mxu0 %v618
    %v753 = vpop.f32.mrf.mxu0
    %v754 = vadd.f32 %v653, %v753
    %v755 = vpop.f32.mrf.mxu0
    %v756 = vpop.f32.mrf.mxu0
    %v757 = vadd.f32 %v653, %v756
    %v758 = vpop.f32.mrf.mxu0
    %759 = vmatprep.mubr.bf16.mxu0 0
    %760 = vmatmul.mubr.bf16.gmra.mxu0 %v619
    %v761 = vpop.f32.mrf.mxu0
    %v762 = vadd.f32 %v653, %v761
    %v763 = vpop.f32.mrf.mxu0
    %v764 = vpop.f32.mrf.mxu0
    %v765 = vadd.f32 %v653, %v764
    %v766 = vpop.f32.mrf.mxu0
    %767 = vmatprep.mubr.bf16.mxu0 0
    %768 = vmatmul.mubr.bf16.gmra.mxu0 %v620
    %v769 = vpop.f32.mrf.mxu0
    %v770 = vadd.f32 %v653, %v769
    %v771 = vpop.f32.mrf.mxu0
    %v772 = vpop.f32.mrf.mxu0
    %v773 = vadd.f32 %v653, %v772
    %v774 = vpop.f32.mrf.mxu0
    %775 = vmatprep.mubr.bf16.mxu0 0
    %776 = vmatmul.mubr.bf16.gmra.mxu0 %v621
    %v777 = vpop.f32.mrf.mxu0
    %v778 = vadd.f32 %v653, %v777
    %v779 = vpop.f32.mrf.mxu0
    %v780 = vpop.f32.mrf.mxu0
    %v781 = vadd.f32 %v653, %v780
    %v782 = vpop.f32.mrf.mxu0
    %783 = vmatprep.mubr.bf16.mxu0 0
    %784 = vmatmul.mubr.bf16.gmra.mxu0 %v622
    %v785 = vpop.f32.mrf.mxu0
    %v786 = vadd.f32 %v653, %v785
    %v787 = vpop.f32.mrf.mxu0
    %v788 = vpop.f32.mrf.mxu0
    %v789 = vadd.f32 %v653, %v788
    %v790 = vpop.f32.mrf.mxu0
    %791 = vmatprep.mubr.bf16.mxu0 0
    %792 = vmatmul.mubr.bf16.gmra.mxu0 %v623
    %v793 = vpop.f32.mrf.mxu0
    %v794 = vadd.f32 %v653, %v793
    %v795 = vpop.f32.mrf.mxu0
    %v796 = vpop.f32.mrf.mxu0
    %v797 = vadd.f32 %v653, %v796
    %v798 = vpop.f32.mrf.mxu0
    %799 = vmatprep.mubr.bf16.mxu0 0
    %800 = vmatmul.mubr.bf16.gmra.mxu0 %v624
    %v801 = vpop.f32.mrf.mxu0
    %v802 = vadd.f32 %v653, %v801
    %v803 = vpop.f32.mrf.mxu0
    %v804 = vpop.f32.mrf.mxu0
    %v805 = vadd.f32 %v653, %v804
    %v806 = vpop.f32.mrf.mxu0
    %807 = vmatprep.mubr.bf16.mxu0 0
    %808 = vmatmul.mubr.bf16.gmra.mxu0 %v625
    %v809 = vpop.f32.mrf.mxu0
    %v810 = vadd.f32 %v653, %v809
    %v811 = vpop.f32.mrf.mxu0
    %v812 = vpop.f32.mrf.mxu0
    %v813 = vadd.f32 %v653, %v812
    %v814 = vpop.f32.mrf.mxu0
    %815 = vmatprep.mubr.bf16.mxu0 0
    %816 = vmatmul.mubr.bf16.gmra.mxu0 %v626
    %v817 = vpop.f32.mrf.mxu0
    %v818 = vadd.f32 %v653, %v817
    %v819 = vpop.f32.mrf.mxu0
    %v820 = vpop.f32.mrf.mxu0
    %v821 = vadd.f32 %v653, %v820
    %v822 = vpop.f32.mrf.mxu0
    %823 = vmatprep.mubr.bf16.mxu0 0
    %824 = vmatmul.mubr.bf16.gmra.mxu0 %v627
    %v825 = vpop.f32.mrf.mxu0
    %v826 = vadd.f32 %v653, %v825
    %v827 = vpop.f32.mrf.mxu0
    %v828 = vpop.f32.mrf.mxu0
    %v829 = vadd.f32 %v653, %v828
    %v830 = vpop.f32.mrf.mxu0
    %831 = vmatprep.mubr.bf16.mxu0 0
    %832 = vmatmul.mubr.bf16.gmra.mxu0 %v628
    %v833 = vpop.f32.mrf.mxu0
    %v834 = vadd.f32 %v653, %v833
    %v835 = vpop.f32.mrf.mxu0
    %v836 = vpop.f32.mrf.mxu0
    %v837 = vadd.f32 %v653, %v836
    %v838 = vpop.f32.mrf.mxu0
    %839 = vmatprep.mubr.bf16.mxu0 0
    %840 = vmatmul.mubr.bf16.gmra.mxu0 %v629
    %v841 = vpop.f32.mrf.mxu0
    %v842 = vadd.f32 %v653, %v841
    %v843 = vpop.f32.mrf.mxu0
    %v844 = vpop.f32.mrf.mxu0
    %v845 = vadd.f32 %v653, %v844
    %v846 = vpop.f32.mrf.mxu0
    %847 = vmatprep.mubr.bf16.mxu0 0
    %848 = vmatmul.mubr.bf16.gmra.mxu0 %v630
    %v849 = vpop.f32.mrf.mxu0
    %v850 = vadd.f32 %v653, %v849
    %v851 = vpop.f32.mrf.mxu0
    %v852 = vpop.f32.mrf.mxu0
    %v853 = vadd.f32 %v653, %v852
    %v854 = vpop.f32.mrf.mxu0
    %855 = vmatprep.mubr.bf16.mxu0 0
    %856 = vmatmul.mubr.bf16.gmra.mxu0 %v631
    %v857 = vpop.f32.mrf.mxu0
    %v858 = vadd.f32 %v653, %v857
    %v859 = vpop.f32.mrf.mxu0
    %v860 = vpop.f32.mrf.mxu0
    %v861 = vadd.f32 %v653, %v860
    %v862 = vpop.f32.mrf.mxu0
    %863 = vdwg.mxu0
    %v864 = vmax.f32 %v738, 0.0
    %v865 = vmax.f32 %v741, 0.0
    %v866 = vmax.f32 %v746, 0.0
    %v867 = vmax.f32 %v749, 0.0
    %v868 = vmax.f32 %v754, 0.0
    %v869 = vmax.f32 %v757, 0.0
    %v870 = vmax.f32 %v762, 0.0
    %v871 = vmax.f32 %v765, 0.0
    %v872 = vmax.f32 %v770, 0.0
    %v873 = vmax.f32 %v773, 0.0
    %v874 = vmax.f32 %v778, 0.0
    %v875 = vmax.f32 %v781, 0.0
    %v876 = vmax.f32 %v786, 0.0
    %v877 = vmax.f32 %v789, 0.0
    %v878 = vmax.f32 %v794, 0.0
    %v879 = vmax.f32 %v797, 0.0
    %v880 = vmax.f32 %v802, 0.0
    %v881 = vmax.f32 %v805, 0.0
    %v882 = vmax.f32 %v810, 0.0
    %v883 = vmax.f32 %v813, 0.0
    %v884 = vmax.f32 %v818, 0.0
    %v885 = vmax.f32 %v821, 0.0
    %v886 = vmax.f32 %v826, 0.0
    %v887 = vmax.f32 %v829, 0.0
    %v888 = vmax.f32 %v834, 0.0
    %v889 = vmax.f32 %v837, 0.0
    %v890 = vmax.f32 %v842, 0.0
    %v891 = vmax.f32 %v845, 0.0
    %v892 = vmax.f32 %v850, 0.0
    %v893 = vmax.f32 %v853, 0.0
    %v894 = vmax.f32 %v858, 0.0
    %v895 = vmax.f32 %v861, 0.0
    %v896 = vpack.c.bf16 %v865, %v864
    %v897 = vpack.c.bf16 %v867, %v866
    %v898 = vpack.c.bf16 %v869, %v868
    %v899 = vpack.c.bf16 %v871, %v870
    %v900 = vpack.c.bf16 %v873, %v872
    %v901 = vpack.c.bf16 %v875, %v874
    %v902 = vpack.c.bf16 %v877, %v876
    %v903 = vpack.c.bf16 %v879, %v878
    %v904 = vpack.c.bf16 %v881, %v880
    %v905 = vpack.c.bf16 %v883, %v882
    %v906 = vpack.c.bf16 %v885, %v884
    %v907 = vpack.c.bf16 %v887, %v886
    %v908 = vpack.c.bf16 %v889, %v888
    %v909 = vpack.c.bf16 %v891, %v890
    %v910 = vpack.c.bf16 %v893, %v892
    %v911 = vpack.c.bf16 %v895, %v894
    %912 = vmatprep.subr.bf16.mxu0 0
    %913 = vmatpush1.bf16.msra.mxu0 %v903
    %914 = vmatprep.subr.bf16.mxu0 0
    %915 = vmatpush1.bf16.msra.mxu0 %v902
    %916 = vmatprep.subr.bf16.mxu0 0
    %917 = vmatpush1.bf16.msra.mxu0 %v901
    %918 = vmatprep.subr.bf16.mxu0 0
    %919 = vmatpush1.bf16.msra.mxu0 %v900
    %920 = vmatprep.subr.bf16.mxu0 0
    %921 = vmatpush1.bf16.msra.mxu0 %v899
    %922 = vmatprep.subr.bf16.mxu0 0
    %923 = vmatpush1.bf16.msra.mxu0 %v898
    %924 = vmatprep.subr.bf16.mxu0 0
    %925 = vmatpush1.bf16.msra.mxu0 %v897
    %926 = vmatprep.subr.bf16.mxu0 0
    %927 = vmatpush1.bf16.msra.mxu0 %v896
    %928 = vmatprep.subr.bf16.mxu0 0
    %929 = vmatpush2.bf16.msra.mxu0 %v911
    %930 = vmatprep.subr.bf16.mxu0 0
    %931 = vmatpush2.bf16.msra.mxu0 %v910
    %932 = vmatprep.subr.bf16.mxu0 0
    %933 = vmatpush2.bf16.msra.mxu0 %v909
    %934 = vmatprep.subr.bf16.mxu0 0
    %935 = vmatpush2.bf16.msra.mxu0 %v908
    %936 = vmatprep.subr.bf16.mxu0 0
    %937 = vmatpush2.bf16.msra.mxu0 %v907
    %938 = vmatprep.subr.bf16.mxu0 0
    %939 = vmatpush2.bf16.msra.mxu0 %v906
    %940 = vmatprep.subr.bf16.mxu0 0
    %941 = vmatpush2.bf16.msra.mxu0 %v905
    %942 = vmatprep.subr.bf16.mxu0 0
    %943 = vmatpush2.bf16.msra.mxu0 %v904
    %944 = vmatprep.mubr.bf16.mxu0 %v296
    %945 = vmatmul.mubr.bf16.gmra.mxu0 %v295
    %v946 = vpop.f32.mrf.mxu0
    %v947 = vadd.f32 0.0, %v946
    %v948 = vpop.f32.mrf.mxu0
    %v949 = vpop.f32.mrf.mxu0
    %v950 = vadd.f32 0.0, %v949
    %v951 = vpop.f32.mrf.mxu0
    %952 = vmatprep.mubr.bf16.mxu0 %v298
    %953 = vmatmul.mubr.bf16.gmra.mxu0 %v297
    %v954 = vpop.f32.mrf.mxu0
    %v955 = vadd.f32 0.0, %v954
    %v956 = vpop.f32.mrf.mxu0
    %v957 = vpop.f32.mrf.mxu0
    %v958 = vadd.f32 0.0, %v957
    %v959 = vpop.f32.mrf.mxu0
    %960 = vmatprep.mubr.bf16.mxu0 %v300
    %961 = vmatmul.mubr.bf16.gmra.mxu0 %v299
    %v962 = vpop.f32.mrf.mxu0
    %v963 = vadd.f32 0.0, %v962
    %v964 = vpop.f32.mrf.mxu0
    %v965 = vpop.f32.mrf.mxu0
    %v966 = vadd.f32 0.0, %v965
    %v967 = vpop.f32.mrf.mxu0
    %968 = vmatprep.mubr.bf16.mxu0 %v302
    %969 = vmatmul.mubr.bf16.gmra.mxu0 %v301
    %v970 = vpop.f32.mrf.mxu0
    %v971 = vadd.f32 0.0, %v970
    %v972 = vpop.f32.mrf.mxu0
    %v973 = vpop.f32.mrf.mxu0
    %v974 = vadd.f32 0.0, %v973
    %v975 = vpop.f32.mrf.mxu0
    %976 = vmatprep.mubr.bf16.mxu0 %v304
    %977 = vmatmul.mubr.bf16.gmra.mxu0 %v303
    %v978 = vpop.f32.mrf.mxu0
    %v979 = vadd.f32 0.0, %v978
    %v980 = vpop.f32.mrf.mxu0
    %v981 = vpop.f32.mrf.mxu0
    %v982 = vadd.f32 0.0, %v981
    %v983 = vpop.f32.mrf.mxu0
    %984 = vmatprep.mubr.bf16.mxu0 %v306
    %985 = vmatmul.mubr.bf16.gmra.mxu0 %v305
    %v986 = vpop.f32.mrf.mxu0
    %v987 = vadd.f32 0.0, %v986
    %v988 = vpop.f32.mrf.mxu0
    %v989 = vpop.f32.mrf.mxu0
    %v990 = vadd.f32 0.0, %v989
    %v991 = vpop.f32.mrf.mxu0
    %992 = vmatprep.mubr.bf16.mxu0 %v308
    %993 = vmatmul.mubr.bf16.gmra.mxu0 %v307
    %v994 = vpop.f32.mrf.mxu0
    %v995 = vadd.f32 0.0, %v994
    %v996 = vpop.f32.mrf.mxu0
    %v997 = vpop.f32.mrf.mxu0
    %v998 = vadd.f32 0.0, %v997
    %v999 = vpop.f32.mrf.mxu0
    %1000 = vmatprep.mubr.bf16.mxu0 %v310
    %1001 = vmatmul.mubr.bf16.gmra.mxu0 %v309
    %v1002 = vpop.f32.mrf.mxu0
    %v1003 = vadd.f32 0.0, %v1002
    %v1004 = vpop.f32.mrf.mxu0
    %v1005 = vpop.f32.mrf.mxu0
    %v1006 = vadd.f32 0.0, %v1005
    %v1007 = vpop.f32.mrf.mxu0
    %1008 = vmatprep.mubr.bf16.mxu0 %v312
    %1009 = vmatmul.mubr.bf16.gmra.mxu0 %v311
    %v1010 = vpop.f32.mrf.mxu0
    %v1011 = vadd.f32 0.0, %v1010
    %v1012 = vpop.f32.mrf.mxu0
    %v1013 = vpop.f32.mrf.mxu0
    %v1014 = vadd.f32 0.0, %v1013
    %v1015 = vpop.f32.mrf.mxu0
    %1016 = vmatprep.mubr.bf16.mxu0 %v314
    %1017 = vmatmul.mubr.bf16.gmra.mxu0 %v313
    %v1018 = vpop.f32.mrf.mxu0
    %v1019 = vadd.f32 0.0, %v1018
    %v1020 = vpop.f32.mrf.mxu0
    %v1021 = vpop.f32.mrf.mxu0
    %v1022 = vadd.f32 0.0, %v1021
    %v1023 = vpop.f32.mrf.mxu0
    %1024 = vmatprep.mubr.bf16.mxu0 %v316
    %1025 = vmatmul.mubr.bf16.gmra.mxu0 %v315
    %v1026 = vpop.f32.mrf.mxu0
    %v1027 = vadd.f32 0.0, %v1026
    %v1028 = vpop.f32.mrf.mxu0
    %v1029 = vpop.f32.mrf.mxu0
    %v1030 = vadd.f32 0.0, %v1029
    %v1031 = vpop.f32.mrf.mxu0
    %1032 = vmatprep.mubr.bf16.mxu0 %v318
    %1033 = vmatmul.mubr.bf16.gmra.mxu0 %v317
    %v1034 = vpop.f32.mrf.mxu0
    %v1035 = vadd.f32 0.0, %v1034
    %v1036 = vpop.f32.mrf.mxu0
    %v1037 = vpop.f32.mrf.mxu0
    %v1038 = vadd.f32 0.0, %v1037
    %v1039 = vpop.f32.mrf.mxu0
    %1040 = vmatprep.mubr.bf16.mxu0 %v320
    %1041 = vmatmul.mubr.bf16.gmra.mxu0 %v319
    %v1042 = vpop.f32.mrf.mxu0
    %v1043 = vadd.f32 0.0, %v1042
    %v1044 = vpop.f32.mrf.mxu0
    %v1045 = vpop.f32.mrf.mxu0
    %v1046 = vadd.f32 0.0, %v1045
    %v1047 = vpop.f32.mrf.mxu0
    %1048 = vmatprep.mubr.bf16.mxu0 %v322
    %1049 = vmatmul.mubr.bf16.gmra.mxu0 %v321
    %v1050 = vpop.f32.mrf.mxu0
    %v1051 = vadd.f32 0.0, %v1050
    %v1052 = vpop.f32.mrf.mxu0
    %v1053 = vpop.f32.mrf.mxu0
    %v1054 = vadd.f32 0.0, %v1053
    %v1055 = vpop.f32.mrf.mxu0
    %1056 = vmatprep.mubr.bf16.mxu0 %v324
    %1057 = vmatmul.mubr.bf16.gmra.mxu0 %v323
    %v1058 = vpop.f32.mrf.mxu0
    %v1059 = vadd.f32 0.0, %v1058
    %v1060 = vpop.f32.mrf.mxu0
    %v1061 = vpop.f32.mrf.mxu0
    %v1062 = vadd.f32 0.0, %v1061
    %v1063 = vpop.f32.mrf.mxu0
    %1064 = vmatprep.mubr.bf16.mxu0 %v326
    %1065 = vmatmul.mubr.bf16.gmra.mxu0 %v325
    %v1066 = vpop.f32.mrf.mxu0
    %v1067 = vadd.f32 0.0, %v1066
    %v1068 = vpop.f32.mrf.mxu0
    %v1069 = vpop.f32.mrf.mxu0
    %v1070 = vadd.f32 0.0, %v1069
    %v1071 = vpop.f32.mrf.mxu0
    %1072 = vdwg.mxu0
    %v1073 = vpack.c.bf16 %v950, %v947
    %v1074 = vpack.c.bf16 %v958, %v955
    %v1075 = vpack.c.bf16 %v966, %v963
    %v1076 = vpack.c.bf16 %v974, %v971
    %v1077 = vpack.c.bf16 %v982, %v979
    %v1078 = vpack.c.bf16 %v990, %v987
    %v1079 = vpack.c.bf16 %v998, %v995
    %v1080 = vpack.c.bf16 %v1006, %v1003
    %v1081 = vpack.c.bf16 %v1014, %v1011
    %v1082 = vpack.c.bf16 %v1022, %v1019
    %v1083 = vpack.c.bf16 %v1030, %v1027
    %v1084 = vpack.c.bf16 %v1038, %v1035
    %v1085 = vpack.c.bf16 %v1046, %v1043
    %v1086 = vpack.c.bf16 %v1054, %v1051
    %v1087 = vpack.c.bf16 %v1062, %v1059
    %v1088 = vpack.c.bf16 %v1070, %v1067
    %v1089 = vld [vmem:[#allocation8] sm:$0xf]
    %v1090 = vld [vmem:[#allocation8 + $0x4] sm:$0xf]
    %v1091 = vld [vmem:[#allocation8 + $0x8] sm:$0xf]
    %v1092 = vld [vmem:[#allocation8 + $0xc] sm:$0xf]
    %v1093 = vld [vmem:[#allocation8 + $0x10] sm:$0xf]
    %v1094 = vld [vmem:[#allocation8 + $0x14] sm:$0xf]
    %v1095 = vld [vmem:[#allocation8 + $0x18] sm:$0xf]
    %v1096 = vld [vmem:[#allocation8 + $0x1c] sm:$0xf]
    %v1097 = vld [vmem:[#allocation8 + $0x20] sm:$0xf]
    %v1098 = vld [vmem:[#allocation8 + $0x24] sm:$0xf]
    %v1099 = vld [vmem:[#allocation8 + $0x28] sm:$0xf]
    %v1100 = vld [vmem:[#allocation8 + $0x2c] sm:$0xf]
    %v1101 = vld [vmem:[#allocation8 + $0x30] sm:$0xf]
    %v1102 = vld [vmem:[#allocation8 + $0x34] sm:$0xf]
    %v1103 = vld [vmem:[#allocation8 + $0x38] sm:$0xf]
    %v1104 = vld [vmem:[#allocation8 + $0x3c] sm:$0xf]
    %v1105 = vld [vmem:[%s5] sm:$0x1]
    %v1107 = vlaneseq
    %v1108 = vshrl.u32 %v1107, 7
    %v1109 = vsub.s32 0, %v1108
    %v1110 = vrot.slane %v1105, %v1109
    %v1128 = vunpack.c.l.b16 %v1089
    %v1129 = vunpack.c.l.b16 %v1090
    %v1130 = vunpack.c.l.b16 %v1091
    %v1131 = vunpack.c.l.b16 %v1092
    %v1132 = vunpack.c.l.b16 %v1093
    %v1133 = vunpack.c.l.b16 %v1094
    %v1134 = vunpack.c.l.b16 %v1095
    %v1135 = vunpack.c.l.b16 %v1096
    %v1136 = vunpack.c.l.b16 %v1097
    %v1137 = vunpack.c.l.b16 %v1098
    %v1138 = vunpack.c.l.b16 %v1099
    %v1139 = vunpack.c.l.b16 %v1100
    %v1140 = vunpack.c.l.b16 %v1101
    %v1141 = vunpack.c.l.b16 %v1102
    %v1142 = vunpack.c.l.b16 %v1103
    %v1143 = vunpack.c.l.b16 %v1104
    %v1144 = vpack.c.b16 %v1129, %v1128
    %v1145 = vpack.c.b16 %v1131, %v1130
    %v1146 = vpack.c.b16 %v1133, %v1132
    %v1147 = vpack.c.b16 %v1135, %v1134
    %v1148 = vpack.c.b16 %v1137, %v1136
    %v1149 = vpack.c.b16 %v1139, %v1138
    %v1150 = vpack.c.b16 %v1141, %v1140
    %v1151 = vpack.c.b16 %v1143, %v1142
    %1160 = vmatprep.subr.bf16.mxu0 0
    %1161 = vmatpush1.bf16.msra.mxu0 %v1151
    %1162 = vmatprep.subr.bf16.mxu0 0
    %1163 = vmatpush1.bf16.msra.mxu0 %v1150
    %1164 = vmatprep.subr.bf16.mxu0 0
    %1165 = vmatpush1.bf16.msra.mxu0 %v1149
    %1166 = vmatprep.subr.bf16.mxu0 0
    %1167 = vmatpush1.bf16.msra.mxu0 %v1148
    %1168 = vmatprep.subr.bf16.mxu0 0
    %1169 = vmatpush1.bf16.msra.mxu0 %v1147
    %1170 = vmatprep.subr.bf16.mxu0 0
    %1171 = vmatpush1.bf16.msra.mxu0 %v1146
    %1172 = vmatprep.subr.bf16.mxu0 0
    %1173 = vmatpush1.bf16.msra.mxu0 %v1145
    %1174 = vmatprep.subr.bf16.mxu0 0
    %1175 = vmatpush1.bf16.msra.mxu0 %v1144
    %1176 = vmatprep.subr.bf16.mxu0 0
    %1177 = vmatpush2.bf16.msra.mxu0 0
    %1178 = vmatprep.subr.bf16.mxu0 0
    %1179 = vmatpush2.bf16.msra.mxu0 0
    %1180 = vmatprep.subr.bf16.mxu0 0
    %1181 = vmatpush2.bf16.msra.mxu0 0
    %1182 = vmatprep.subr.bf16.mxu0 0
    %1183 = vmatpush2.bf16.msra.mxu0 0
    %1184 = vmatprep.subr.bf16.mxu0 0
    %1185 = vmatpush2.bf16.msra.mxu0 0
    %1186 = vmatprep.subr.bf16.mxu0 0
    %1187 = vmatpush2.bf16.msra.mxu0 0
    %1188 = vmatprep.subr.bf16.mxu0 0
    %1189 = vmatpush2.bf16.msra.mxu0 0
    %1190 = vmatprep.subr.bf16.mxu0 0
    %1191 = vmatpush2.bf16.msra.mxu0 0
    %1192 = vmatprep.mubr.bf16.mxu0 0
    %1193 = vmatmul.mubr.bf16.gmra.mxu0 %v1073
    %v1194 = vpop.f32.mrf.mxu0
    %v1195 = vadd.f32 %v1110, %v1194
    %v1196 = vpop.f32.mrf.mxu0
    %v1197 = vpop.f32.mrf.mxu0
    %v1198 = vadd.f32 %v1110, %v1197
    %v1199 = vpop.f32.mrf.mxu0
    %1200 = vmatprep.mubr.bf16.mxu0 0
    %1201 = vmatmul.mubr.bf16.gmra.mxu0 %v1074
    %v1202 = vpop.f32.mrf.mxu0
    %v1203 = vadd.f32 %v1110, %v1202
    %v1204 = vpop.f32.mrf.mxu0
    %v1205 = vpop.f32.mrf.mxu0
    %v1206 = vadd.f32 %v1110, %v1205
    %v1207 = vpop.f32.mrf.mxu0
    %1208 = vmatprep.mubr.bf16.mxu0 0
    %1209 = vmatmul.mubr.bf16.gmra.mxu0 %v1075
    %v1210 = vpop.f32.mrf.mxu0
    %v1211 = vadd.f32 %v1110, %v1210
    %v1212 = vpop.f32.mrf.mxu0
    %v1213 = vpop.f32.mrf.mxu0
    %v1214 = vadd.f32 %v1110, %v1213
    %v1215 = vpop.f32.mrf.mxu0
    %1216 = vmatprep.mubr.bf16.mxu0 0
    %1217 = vmatmul.mubr.bf16.gmra.mxu0 %v1076
    %v1218 = vpop.f32.mrf.mxu0
    %v1219 = vadd.f32 %v1110, %v1218
    %v1220 = vpop.f32.mrf.mxu0
    %v1221 = vpop.f32.mrf.mxu0
    %v1222 = vadd.f32 %v1110, %v1221
    %v1223 = vpop.f32.mrf.mxu0
    %1224 = vmatprep.mubr.bf16.mxu0 0
    %1225 = vmatmul.mubr.bf16.gmra.mxu0 %v1077
    %v1226 = vpop.f32.mrf.mxu0
    %v1227 = vadd.f32 %v1110, %v1226
    %v1228 = vpop.f32.mrf.mxu0
    %v1229 = vpop.f32.mrf.mxu0
    %v1230 = vadd.f32 %v1110, %v1229
    %v1231 = vpop.f32.mrf.mxu0
    %1232 = vmatprep.mubr.bf16.mxu0 0
    %1233 = vmatmul.mubr.bf16.gmra.mxu0 %v1078
    %v1234 = vpop.f32.mrf.mxu0
    %v1235 = vadd.f32 %v1110, %v1234
    %v1236 = vpop.f32.mrf.mxu0
    %v1237 = vpop.f32.mrf.mxu0
    %v1238 = vadd.f32 %v1110, %v1237
    %v1239 = vpop.f32.mrf.mxu0
    %1240 = vmatprep.mubr.bf16.mxu0 0
    %1241 = vmatmul.mubr.bf16.gmra.mxu0 %v1079
    %v1242 = vpop.f32.mrf.mxu0
    %v1243 = vadd.f32 %v1110, %v1242
    %v1244 = vpop.f32.mrf.mxu0
    %v1245 = vpop.f32.mrf.mxu0
    %v1246 = vadd.f32 %v1110, %v1245
    %v1247 = vpop.f32.mrf.mxu0
    %1248 = vmatprep.mubr.bf16.mxu0 0
    %1249 = vmatmul.mubr.bf16.gmra.mxu0 %v1080
    %v1250 = vpop.f32.mrf.mxu0
    %v1251 = vadd.f32 %v1110, %v1250
    %v1252 = vpop.f32.mrf.mxu0
    %v1253 = vpop.f32.mrf.mxu0
    %v1254 = vadd.f32 %v1110, %v1253
    %v1255 = vpop.f32.mrf.mxu0
    %1256 = vmatprep.mubr.bf16.mxu0 0
    %1257 = vmatmul.mubr.bf16.gmra.mxu0 %v1081
    %v1258 = vpop.f32.mrf.mxu0
    %v1259 = vadd.f32 %v1110, %v1258
    %v1260 = vpop.f32.mrf.mxu0
    %v1261 = vpop.f32.mrf.mxu0
    %v1262 = vadd.f32 %v1110, %v1261
    %v1263 = vpop.f32.mrf.mxu0
    %1264 = vmatprep.mubr.bf16.mxu0 0
    %1265 = vmatmul.mubr.bf16.gmra.mxu0 %v1082
    %v1266 = vpop.f32.mrf.mxu0
    %v1267 = vadd.f32 %v1110, %v1266
    %v1268 = vpop.f32.mrf.mxu0
    %v1269 = vpop.f32.mrf.mxu0
    %v1270 = vadd.f32 %v1110, %v1269
    %v1271 = vpop.f32.mrf.mxu0
    %1272 = vmatprep.mubr.bf16.mxu0 0
    %1273 = vmatmul.mubr.bf16.gmra.mxu0 %v1083
    %v1274 = vpop.f32.mrf.mxu0
    %v1275 = vadd.f32 %v1110, %v1274
    %v1276 = vpop.f32.mrf.mxu0
    %v1277 = vpop.f32.mrf.mxu0
    %v1278 = vadd.f32 %v1110, %v1277
    %v1279 = vpop.f32.mrf.mxu0
    %1280 = vmatprep.mubr.bf16.mxu0 0
    %1281 = vmatmul.mubr.bf16.gmra.mxu0 %v1084
    %v1282 = vpop.f32.mrf.mxu0
    %v1283 = vadd.f32 %v1110, %v1282
    %v1284 = vpop.f32.mrf.mxu0
    %v1285 = vpop.f32.mrf.mxu0
    %v1286 = vadd.f32 %v1110, %v1285
    %v1287 = vpop.f32.mrf.mxu0
    %1288 = vmatprep.mubr.bf16.mxu0 0
    %1289 = vmatmul.mubr.bf16.gmra.mxu0 %v1085
    %v1290 = vpop.f32.mrf.mxu0
    %v1291 = vadd.f32 %v1110, %v1290
    %v1292 = vpop.f32.mrf.mxu0
    %v1293 = vpop.f32.mrf.mxu0
    %v1294 = vadd.f32 %v1110, %v1293
    %v1295 = vpop.f32.mrf.mxu0
    %1296 = vmatprep.mubr.bf16.mxu0 0
    %1297 = vmatmul.mubr.bf16.gmra.mxu0 %v1086
    %v1298 = vpop.f32.mrf.mxu0
    %v1299 = vadd.f32 %v1110, %v1298
    %v1300 = vpop.f32.mrf.mxu0
    %v1301 = vpop.f32.mrf.mxu0
    %v1302 = vadd.f32 %v1110, %v1301
    %v1303 = vpop.f32.mrf.mxu0
    %1304 = vmatprep.mubr.bf16.mxu0 0
    %1305 = vmatmul.mubr.bf16.gmra.mxu0 %v1087
    %v1306 = vpop.f32.mrf.mxu0
    %v1307 = vadd.f32 %v1110, %v1306
    %v1308 = vpop.f32.mrf.mxu0
    %v1309 = vpop.f32.mrf.mxu0
    %v1310 = vadd.f32 %v1110, %v1309
    %v1311 = vpop.f32.mrf.mxu0
    %1312 = vmatprep.mubr.bf16.mxu0 0
    %1313 = vmatmul.mubr.bf16.gmra.mxu0 %v1088
    %v1314 = vpop.f32.mrf.mxu0
    %v1315 = vadd.f32 %v1110, %v1314
    %v1316 = vpop.f32.mrf.mxu0
    %v1317 = vpop.f32.mrf.mxu0
    %v1318 = vadd.f32 %v1110, %v1317
    %v1319 = vpop.f32.mrf.mxu0
    %1320 = vdwg.mxu0
    %v1321 = vmax.f32 %v1195, 0.0
    %v1322 = vmax.f32 %v1198, 0.0
    %v1323 = vmax.f32 %v1203, 0.0
    %v1324 = vmax.f32 %v1206, 0.0
    %v1325 = vmax.f32 %v1211, 0.0
    %v1326 = vmax.f32 %v1214, 0.0
    %v1327 = vmax.f32 %v1219, 0.0
    %v1328 = vmax.f32 %v1222, 0.0
    %v1329 = vmax.f32 %v1227, 0.0
    %v1330 = vmax.f32 %v1230, 0.0
    %v1331 = vmax.f32 %v1235, 0.0
    %v1332 = vmax.f32 %v1238, 0.0
    %v1333 = vmax.f32 %v1243, 0.0
    %v1334 = vmax.f32 %v1246, 0.0
    %v1335 = vmax.f32 %v1251, 0.0
    %v1336 = vmax.f32 %v1254, 0.0
    %v1337 = vmax.f32 %v1259, 0.0
    %v1338 = vmax.f32 %v1262, 0.0
    %v1339 = vmax.f32 %v1267, 0.0
    %v1340 = vmax.f32 %v1270, 0.0
    %v1341 = vmax.f32 %v1275, 0.0
    %v1342 = vmax.f32 %v1278, 0.0
    %v1343 = vmax.f32 %v1283, 0.0
    %v1344 = vmax.f32 %v1286, 0.0
    %v1345 = vmax.f32 %v1291, 0.0
    %v1346 = vmax.f32 %v1294, 0.0
    %v1347 = vmax.f32 %v1299, 0.0
    %v1348 = vmax.f32 %v1302, 0.0
    %v1349 = vmax.f32 %v1307, 0.0
    %v1350 = vmax.f32 %v1310, 0.0
    %v1351 = vmax.f32 %v1315, 0.0
    %v1352 = vmax.f32 %v1318, 0.0
    %v1353 = vpack.c.bf16 %v1322, %v1321
    %v1354 = vpack.c.bf16 %v1324, %v1323
    %v1355 = vpack.c.bf16 %v1326, %v1325
    %v1356 = vpack.c.bf16 %v1328, %v1327
    %v1357 = vpack.c.bf16 %v1330, %v1329
    %v1358 = vpack.c.bf16 %v1332, %v1331
    %v1359 = vpack.c.bf16 %v1334, %v1333
    %v1360 = vpack.c.bf16 %v1336, %v1335
    %v1361 = vpack.c.bf16 %v1338, %v1337
    %v1362 = vpack.c.bf16 %v1340, %v1339
    %v1363 = vpack.c.bf16 %v1342, %v1341
    %v1364 = vpack.c.bf16 %v1344, %v1343
    %v1365 = vpack.c.bf16 %v1346, %v1345
    %v1366 = vpack.c.bf16 %v1348, %v1347
    %v1367 = vpack.c.bf16 %v1350, %v1349
    %v1368 = vpack.c.bf16 %v1352, %v1351
    %1369 = vmatprep.subr.bf16.mxu0 0
    %1370 = vmatpush1.bf16.msra.mxu0 %v1360
    %1371 = vmatprep.subr.bf16.mxu0 0
    %1372 = vmatpush1.bf16.msra.mxu0 %v1359
    %1373 = vmatprep.subr.bf16.mxu0 0
    %1374 = vmatpush1.bf16.msra.mxu0 %v1358
    %1375 = vmatprep.subr.bf16.mxu0 0
    %1376 = vmatpush1.bf16.msra.mxu0 %v1357
    %1377 = vmatprep.subr.bf16.mxu0 0
    %1378 = vmatpush1.bf16.msra.mxu0 %v1356
    %1379 = vmatprep.subr.bf16.mxu0 0
    %1380 = vmatpush1.bf16.msra.mxu0 %v1355
    %1381 = vmatprep.subr.bf16.mxu0 0
    %1382 = vmatpush1.bf16.msra.mxu0 %v1354
    %1383 = vmatprep.subr.bf16.mxu0 0
    %1384 = vmatpush1.bf16.msra.mxu0 %v1353
    %1385 = vmatprep.subr.bf16.mxu0 0
    %1386 = vmatpush2.bf16.msra.mxu0 %v1368
    %1387 = vmatprep.subr.bf16.mxu0 0
    %1388 = vmatpush2.bf16.msra.mxu0 %v1367
    %1389 = vmatprep.subr.bf16.mxu0 0
    %1390 = vmatpush2.bf16.msra.mxu0 %v1366
    %1391 = vmatprep.subr.bf16.mxu0 0
    %1392 = vmatpush2.bf16.msra.mxu0 %v1365
    %1393 = vmatprep.subr.bf16.mxu0 0
    %1394 = vmatpush2.bf16.msra.mxu0 %v1364
    %1395 = vmatprep.subr.bf16.mxu0 0
    %1396 = vmatpush2.bf16.msra.mxu0 %v1363
    %1397 = vmatprep.subr.bf16.mxu0 0
    %1398 = vmatpush2.bf16.msra.mxu0 %v1362
    %1399 = vmatprep.subr.bf16.mxu0 0
    %1400 = vmatpush2.bf16.msra.mxu0 %v1361
    %1401 = vmatprep.mubr.bf16.mxu0 %v296
    %1402 = vmatmul.mubr.bf16.gmra.mxu0 %v295
    %v1403 = vpop.f32.mrf.mxu0
    %v1404 = vadd.f32 0.0, %v1403
    %v1405 = vpop.f32.mrf.mxu0
    %v1406 = vpop.f32.mrf.mxu0
    %v1407 = vadd.f32 0.0, %v1406
    %v1408 = vpop.f32.mrf.mxu0
    %1409 = vmatprep.mubr.bf16.mxu0 %v298
    %1410 = vmatmul.mubr.bf16.gmra.mxu0 %v297
    %v1411 = vpop.f32.mrf.mxu0
    %v1412 = vadd.f32 0.0, %v1411
    %v1413 = vpop.f32.mrf.mxu0
    %v1414 = vpop.f32.mrf.mxu0
    %v1415 = vadd.f32 0.0, %v1414
    %v1416 = vpop.f32.mrf.mxu0
    %1417 = vmatprep.mubr.bf16.mxu0 %v300
    %1418 = vmatmul.mubr.bf16.gmra.mxu0 %v299
    %v1419 = vpop.f32.mrf.mxu0
    %v1420 = vadd.f32 0.0, %v1419
    %v1421 = vpop.f32.mrf.mxu0
    %v1422 = vpop.f32.mrf.mxu0
    %v1423 = vadd.f32 0.0, %v1422
    %v1424 = vpop.f32.mrf.mxu0
    %1425 = vmatprep.mubr.bf16.mxu0 %v302
    %1426 = vmatmul.mubr.bf16.gmra.mxu0 %v301
    %v1427 = vpop.f32.mrf.mxu0
    %v1428 = vadd.f32 0.0, %v1427
    %v1429 = vpop.f32.mrf.mxu0
    %v1430 = vpop.f32.mrf.mxu0
    %v1431 = vadd.f32 0.0, %v1430
    %v1432 = vpop.f32.mrf.mxu0
    %1433 = vmatprep.mubr.bf16.mxu0 %v304
    %1434 = vmatmul.mubr.bf16.gmra.mxu0 %v303
    %v1435 = vpop.f32.mrf.mxu0
    %v1436 = vadd.f32 0.0, %v1435
    %v1437 = vpop.f32.mrf.mxu0
    %v1438 = vpop.f32.mrf.mxu0
    %v1439 = vadd.f32 0.0, %v1438
    %v1440 = vpop.f32.mrf.mxu0
    %1441 = vmatprep.mubr.bf16.mxu0 %v306
    %1442 = vmatmul.mubr.bf16.gmra.mxu0 %v305
    %v1443 = vpop.f32.mrf.mxu0
    %v1444 = vadd.f32 0.0, %v1443
    %v1445 = vpop.f32.mrf.mxu0
    %v1446 = vpop.f32.mrf.mxu0
    %v1447 = vadd.f32 0.0, %v1446
    %v1448 = vpop.f32.mrf.mxu0
    %1449 = vmatprep.mubr.bf16.mxu0 %v308
    %1450 = vmatmul.mubr.bf16.gmra.mxu0 %v307
    %v1451 = vpop.f32.mrf.mxu0
    %v1452 = vadd.f32 0.0, %v1451
    %v1453 = vpop.f32.mrf.mxu0
    %v1454 = vpop.f32.mrf.mxu0
    %v1455 = vadd.f32 0.0, %v1454
    %v1456 = vpop.f32.mrf.mxu0
    %1457 = vmatprep.mubr.bf16.mxu0 %v310
    %1458 = vmatmul.mubr.bf16.gmra.mxu0 %v309
    %v1459 = vpop.f32.mrf.mxu0
    %v1460 = vadd.f32 0.0, %v1459
    %v1461 = vpop.f32.mrf.mxu0
    %v1462 = vpop.f32.mrf.mxu0
    %v1463 = vadd.f32 0.0, %v1462
    %v1464 = vpop.f32.mrf.mxu0
    %1465 = vmatprep.mubr.bf16.mxu0 %v312
    %1466 = vmatmul.mubr.bf16.gmra.mxu0 %v311
    %v1467 = vpop.f32.mrf.mxu0
    %v1468 = vadd.f32 0.0, %v1467
    %v1469 = vpop.f32.mrf.mxu0
    %v1470 = vpop.f32.mrf.mxu0
    %v1471 = vadd.f32 0.0, %v1470
    %v1472 = vpop.f32.mrf.mxu0
    %1473 = vmatprep.mubr.bf16.mxu0 %v314
    %1474 = vmatmul.mubr.bf16.gmra.mxu0 %v313
    %v1475 = vpop.f32.mrf.mxu0
    %v1476 = vadd.f32 0.0, %v1475
    %v1477 = vpop.f32.mrf.mxu0
    %v1478 = vpop.f32.mrf.mxu0
    %v1479 = vadd.f32 0.0, %v1478
    %v1480 = vpop.f32.mrf.mxu0
    %1481 = vmatprep.mubr.bf16.mxu0 %v316
    %1482 = vmatmul.mubr.bf16.gmra.mxu0 %v315
    %v1483 = vpop.f32.mrf.mxu0
    %v1484 = vadd.f32 0.0, %v1483
    %v1485 = vpop.f32.mrf.mxu0
    %v1486 = vpop.f32.mrf.mxu0
    %v1487 = vadd.f32 0.0, %v1486
    %v1488 = vpop.f32.mrf.mxu0
    %1489 = vmatprep.mubr.bf16.mxu0 %v318
    %1490 = vmatmul.mubr.bf16.gmra.mxu0 %v317
    %v1491 = vpop.f32.mrf.mxu0
    %v1492 = vadd.f32 0.0, %v1491
    %v1493 = vpop.f32.mrf.mxu0
    %v1494 = vpop.f32.mrf.mxu0
    %v1495 = vadd.f32 0.0, %v1494
    %v1496 = vpop.f32.mrf.mxu0
    %1497 = vmatprep.mubr.bf16.mxu0 %v320
    %1498 = vmatmul.mubr.bf16.gmra.mxu0 %v319
    %v1499 = vpop.f32.mrf.mxu0
    %v1500 = vadd.f32 0.0, %v1499
    %v1501 = vpop.f32.mrf.mxu0
    %v1502 = vpop.f32.mrf.mxu0
    %v1503 = vadd.f32 0.0, %v1502
    %v1504 = vpop.f32.mrf.mxu0
    %1505 = vmatprep.mubr.bf16.mxu0 %v322
    %1506 = vmatmul.mubr.bf16.gmra.mxu0 %v321
    %v1507 = vpop.f32.mrf.mxu0
    %v1508 = vadd.f32 0.0, %v1507
    %v1509 = vpop.f32.mrf.mxu0
    %v1510 = vpop.f32.mrf.mxu0
    %v1511 = vadd.f32 0.0, %v1510
    %v1512 = vpop.f32.mrf.mxu0
    %1513 = vmatprep.mubr.bf16.mxu0 %v324
    %1514 = vmatmul.mubr.bf16.gmra.mxu0 %v323
    %v1515 = vpop.f32.mrf.mxu0
    %v1516 = vadd.f32 0.0, %v1515
    %v1517 = vpop.f32.mrf.mxu0
    %v1518 = vpop.f32.mrf.mxu0
    %v1519 = vadd.f32 0.0, %v1518
    %v1520 = vpop.f32.mrf.mxu0
    %1521 = vmatprep.mubr.bf16.mxu0 %v326
    %1522 = vmatmul.mubr.bf16.gmra.mxu0 %v325
    %v1523 = vpop.f32.mrf.mxu0
    %v1524 = vadd.f32 0.0, %v1523
    %v1525 = vpop.f32.mrf.mxu0
    %v1526 = vpop.f32.mrf.mxu0
    %v1527 = vadd.f32 0.0, %v1526
    %v1528 = vpop.f32.mrf.mxu0
    %1529 = vdwg.mxu0
    %v1530 = vpack.c.bf16 %v1407, %v1404
    %v1531 = vpack.c.bf16 %v1415, %v1412
    %v1532 = vpack.c.bf16 %v1423, %v1420
    %v1533 = vpack.c.bf16 %v1431, %v1428
    %v1534 = vpack.c.bf16 %v1439, %v1436
    %v1535 = vpack.c.bf16 %v1447, %v1444
    %v1536 = vpack.c.bf16 %v1455, %v1452
    %v1537 = vpack.c.bf16 %v1463, %v1460
    %v1538 = vpack.c.bf16 %v1471, %v1468
    %v1539 = vpack.c.bf16 %v1479, %v1476
    %v1540 = vpack.c.bf16 %v1487, %v1484
    %v1541 = vpack.c.bf16 %v1495, %v1492
    %v1542 = vpack.c.bf16 %v1503, %v1500
    %v1543 = vpack.c.bf16 %v1511, %v1508
    %v1544 = vpack.c.bf16 %v1519, %v1516
    %v1545 = vpack.c.bf16 %v1527, %v1524
    %v1546 = vld [vmem:[#allocation10] sm:$0xf]
    %v1547 = vld [vmem:[#allocation10 + $0x4] sm:$0xf]
    %v1548 = vld [vmem:[#allocation10 + $0x8] sm:$0xf]
    %v1549 = vld [vmem:[#allocation10 + $0xc] sm:$0xf]
    %v1550 = vld [vmem:[#allocation10 + $0x10] sm:$0xf]
    %v1551 = vld [vmem:[#allocation10 + $0x14] sm:$0xf]
    %v1552 = vld [vmem:[#allocation10 + $0x18] sm:$0xf]
    %v1553 = vld [vmem:[#allocation10 + $0x1c] sm:$0xf]
    %v1554 = vld [vmem:[#allocation10 + $0x20] sm:$0xf]
    %v1555 = vld [vmem:[#allocation10 + $0x24] sm:$0xf]
    %v1556 = vld [vmem:[#allocation10 + $0x28] sm:$0xf]
    %v1557 = vld [vmem:[#allocation10 + $0x2c] sm:$0xf]
    %v1558 = vld [vmem:[#allocation10 + $0x30] sm:$0xf]
    %v1559 = vld [vmem:[#allocation10 + $0x34] sm:$0xf]
    %v1560 = vld [vmem:[#allocation10 + $0x38] sm:$0xf]
    %v1561 = vld [vmem:[#allocation10 + $0x3c] sm:$0xf]
    %v1562 = vld [vmem:[%s7] sm:$0x1]
    %v1564 = vlaneseq
    %v1565 = vshrl.u32 %v1564, 7
    %v1566 = vsub.s32 0, %v1565
    %v1567 = vrot.slane %v1562, %v1566
    %v1585 = vunpack.c.l.b16 %v1546
    %v1586 = vunpack.c.l.b16 %v1547
    %v1587 = vunpack.c.l.b16 %v1548
    %v1588 = vunpack.c.l.b16 %v1549
    %v1589 = vunpack.c.l.b16 %v1550
    %v1590 = vunpack.c.l.b16 %v1551
    %v1591 = vunpack.c.l.b16 %v1552
    %v1592 = vunpack.c.l.b16 %v1553
    %v1593 = vunpack.c.l.b16 %v1554
    %v1594 = vunpack.c.l.b16 %v1555
    %v1595 = vunpack.c.l.b16 %v1556
    %v1596 = vunpack.c.l.b16 %v1557
    %v1597 = vunpack.c.l.b16 %v1558
    %v1598 = vunpack.c.l.b16 %v1559
    %v1599 = vunpack.c.l.b16 %v1560
    %v1600 = vunpack.c.l.b16 %v1561
    %v1601 = vpack.c.b16 %v1586, %v1585
    %v1602 = vpack.c.b16 %v1588, %v1587
    %v1603 = vpack.c.b16 %v1590, %v1589
    %v1604 = vpack.c.b16 %v1592, %v1591
    %v1605 = vpack.c.b16 %v1594, %v1593
    %v1606 = vpack.c.b16 %v1596, %v1595
    %v1607 = vpack.c.b16 %v1598, %v1597
    %v1608 = vpack.c.b16 %v1600, %v1599
    %1617 = vmatprep.subr.bf16.mxu0 0
    %1618 = vmatpush1.bf16.msra.mxu0 %v1608
    %1619 = vmatprep.subr.bf16.mxu0 0
    %1620 = vmatpush1.bf16.msra.mxu0 %v1607
    %1621 = vmatprep.subr.bf16.mxu0 0
    %1622 = vmatpush1.bf16.msra.mxu0 %v1606
    %1623 = vmatprep.subr.bf16.mxu0 0
    %1624 = vmatpush1.bf16.msra.mxu0 %v1605
    %1625 = vmatprep.subr.bf16.mxu0 0
    %1626 = vmatpush1.bf16.msra.mxu0 %v1604
    %1627 = vmatprep.subr.bf16.mxu0 0
    %1628 = vmatpush1.bf16.msra.mxu0 %v1603
    %1629 = vmatprep.subr.bf16.mxu0 0
    %1630 = vmatpush1.bf16.msra.mxu0 %v1602
    %1631 = vmatprep.subr.bf16.mxu0 0
    %1632 = vmatpush1.bf16.msra.mxu0 %v1601
    %1633 = vmatprep.subr.bf16.mxu0 0
    %1634 = vmatpush2.bf16.msra.mxu0 0
    %1635 = vmatprep.subr.bf16.mxu0 0
    %1636 = vmatpush2.bf16.msra.mxu0 0
    %1637 = vmatprep.subr.bf16.mxu0 0
    %1638 = vmatpush2.bf16.msra.mxu0 0
    %1639 = vmatprep.subr.bf16.mxu0 0
    %1640 = vmatpush2.bf16.msra.mxu0 0
    %1641 = vmatprep.subr.bf16.mxu0 0
    %1642 = vmatpush2.bf16.msra.mxu0 0
    %1643 = vmatprep.subr.bf16.mxu0 0
    %1644 = vmatpush2.bf16.msra.mxu0 0
    %1645 = vmatprep.subr.bf16.mxu0 0
    %1646 = vmatpush2.bf16.msra.mxu0 0
    %1647 = vmatprep.subr.bf16.mxu0 0
    %1648 = vmatpush2.bf16.msra.mxu0 0
    %1649 = vmatprep.mubr.bf16.mxu0 0
    %1650 = vmatmul.mubr.bf16.gmra.mxu0 %v1530
    %v1651 = vpop.f32.mrf.mxu0
    %v1652 = vadd.f32 %v1567, %v1651
    %v1653 = vpop.f32.mrf.mxu0
    %v1654 = vpop.f32.mrf.mxu0
    %v1655 = vadd.f32 %v1567, %v1654
    %v1656 = vpop.f32.mrf.mxu0
    %1657 = vmatprep.mubr.bf16.mxu0 0
    %1658 = vmatmul.mubr.bf16.gmra.mxu0 %v1531
    %v1659 = vpop.f32.mrf.mxu0
    %v1660 = vadd.f32 %v1567, %v1659
    %v1661 = vpop.f32.mrf.mxu0
    %v1662 = vpop.f32.mrf.mxu0
    %v1663 = vadd.f32 %v1567, %v1662
    %v1664 = vpop.f32.mrf.mxu0
    %1665 = vmatprep.mubr.bf16.mxu0 0
    %1666 = vmatmul.mubr.bf16.gmra.mxu0 %v1532
    %v1667 = vpop.f32.mrf.mxu0
    %v1668 = vadd.f32 %v1567, %v1667
    %v1669 = vpop.f32.mrf.mxu0
    %v1670 = vpop.f32.mrf.mxu0
    %v1671 = vadd.f32 %v1567, %v1670
    %v1672 = vpop.f32.mrf.mxu0
    %1673 = vmatprep.mubr.bf16.mxu0 0
    %1674 = vmatmul.mubr.bf16.gmra.mxu0 %v1533
    %v1675 = vpop.f32.mrf.mxu0
    %v1676 = vadd.f32 %v1567, %v1675
    %v1677 = vpop.f32.mrf.mxu0
    %v1678 = vpop.f32.mrf.mxu0
    %v1679 = vadd.f32 %v1567, %v1678
    %v1680 = vpop.f32.mrf.mxu0
    %1681 = vmatprep.mubr.bf16.mxu0 0
    %1682 = vmatmul.mubr.bf16.gmra.mxu0 %v1534
    %v1683 = vpop.f32.mrf.mxu0
    %v1684 = vadd.f32 %v1567, %v1683
    %v1685 = vpop.f32.mrf.mxu0
    %v1686 = vpop.f32.mrf.mxu0
    %v1687 = vadd.f32 %v1567, %v1686
    %v1688 = vpop.f32.mrf.mxu0
    %1689 = vmatprep.mubr.bf16.mxu0 0
    %1690 = vmatmul.mubr.bf16.gmra.mxu0 %v1535
    %v1691 = vpop.f32.mrf.mxu0
    %v1692 = vadd.f32 %v1567, %v1691
    %v1693 = vpop.f32.mrf.mxu0
    %v1694 = vpop.f32.mrf.mxu0
    %v1695 = vadd.f32 %v1567, %v1694
    %v1696 = vpop.f32.mrf.mxu0
    %1697 = vmatprep.mubr.bf16.mxu0 0
    %1698 = vmatmul.mubr.bf16.gmra.mxu0 %v1536
    %v1699 = vpop.f32.mrf.mxu0
    %v1700 = vadd.f32 %v1567, %v1699
    %v1701 = vpop.f32.mrf.mxu0
    %v1702 = vpop.f32.mrf.mxu0
    %v1703 = vadd.f32 %v1567, %v1702
    %v1704 = vpop.f32.mrf.mxu0
    %1705 = vmatprep.mubr.bf16.mxu0 0
    %1706 = vmatmul.mubr.bf16.gmra.mxu0 %v1537
    %v1707 = vpop.f32.mrf.mxu0
    %v1708 = vadd.f32 %v1567, %v1707
    %v1709 = vpop.f32.mrf.mxu0
    %v1710 = vpop.f32.mrf.mxu0
    %v1711 = vadd.f32 %v1567, %v1710
    %v1712 = vpop.f32.mrf.mxu0
    %1713 = vmatprep.mubr.bf16.mxu0 0
    %1714 = vmatmul.mubr.bf16.gmra.mxu0 %v1538
    %v1715 = vpop.f32.mrf.mxu0
    %v1716 = vadd.f32 %v1567, %v1715
    %v1717 = vpop.f32.mrf.mxu0
    %v1718 = vpop.f32.mrf.mxu0
    %v1719 = vadd.f32 %v1567, %v1718
    %v1720 = vpop.f32.mrf.mxu0
    %1721 = vmatprep.mubr.bf16.mxu0 0
    %1722 = vmatmul.mubr.bf16.gmra.mxu0 %v1539
    %v1723 = vpop.f32.mrf.mxu0
    %v1724 = vadd.f32 %v1567, %v1723
    %v1725 = vpop.f32.mrf.mxu0
    %v1726 = vpop.f32.mrf.mxu0
    %v1727 = vadd.f32 %v1567, %v1726
    %v1728 = vpop.f32.mrf.mxu0
    %1729 = vmatprep.mubr.bf16.mxu0 0
    %1730 = vmatmul.mubr.bf16.gmra.mxu0 %v1540
    %v1731 = vpop.f32.mrf.mxu0
    %v1732 = vadd.f32 %v1567, %v1731
    %v1733 = vpop.f32.mrf.mxu0
    %v1734 = vpop.f32.mrf.mxu0
    %v1735 = vadd.f32 %v1567, %v1734
    %v1736 = vpop.f32.mrf.mxu0
    %1737 = vmatprep.mubr.bf16.mxu0 0
    %1738 = vmatmul.mubr.bf16.gmra.mxu0 %v1541
    %v1739 = vpop.f32.mrf.mxu0
    %v1740 = vadd.f32 %v1567, %v1739
    %v1741 = vpop.f32.mrf.mxu0
    %v1742 = vpop.f32.mrf.mxu0
    %v1743 = vadd.f32 %v1567, %v1742
    %v1744 = vpop.f32.mrf.mxu0
    %1745 = vmatprep.mubr.bf16.mxu0 0
    %1746 = vmatmul.mubr.bf16.gmra.mxu0 %v1542
    %v1747 = vpop.f32.mrf.mxu0
    %v1748 = vadd.f32 %v1567, %v1747
    %v1749 = vpop.f32.mrf.mxu0
    %v1750 = vpop.f32.mrf.mxu0
    %v1751 = vadd.f32 %v1567, %v1750
    %v1752 = vpop.f32.mrf.mxu0
    %1753 = vmatprep.mubr.bf16.mxu0 0
    %1754 = vmatmul.mubr.bf16.gmra.mxu0 %v1543
    %v1755 = vpop.f32.mrf.mxu0
    %v1756 = vadd.f32 %v1567, %v1755
    %v1757 = vpop.f32.mrf.mxu0
    %v1758 = vpop.f32.mrf.mxu0
    %v1759 = vadd.f32 %v1567, %v1758
    %v1760 = vpop.f32.mrf.mxu0
    %1761 = vmatprep.mubr.bf16.mxu0 0
    %1762 = vmatmul.mubr.bf16.gmra.mxu0 %v1544
    %v1763 = vpop.f32.mrf.mxu0
    %v1764 = vadd.f32 %v1567, %v1763
    %v1765 = vpop.f32.mrf.mxu0
    %v1766 = vpop.f32.mrf.mxu0
    %v1767 = vadd.f32 %v1567, %v1766
    %v1768 = vpop.f32.mrf.mxu0
    %1769 = vmatprep.mubr.bf16.mxu0 0
    %1770 = vmatmul.mubr.bf16.gmra.mxu0 %v1545
    %v1771 = vpop.f32.mrf.mxu0
    %v1772 = vadd.f32 %v1567, %v1771
    %v1773 = vpop.f32.mrf.mxu0
    %v1774 = vpop.f32.mrf.mxu0
    %v1775 = vadd.f32 %v1567, %v1774
    %v1776 = vpop.f32.mrf.mxu0
    %1777 = vdwg.mxu0
    %v1778 = vpack.c.bf16 %v1655, %v1652
    %v1779 = vpack.c.bf16 %v1663, %v1660
    %v1780 = vpack.c.bf16 %v1671, %v1668
    %v1781 = vpack.c.bf16 %v1679, %v1676
    %v1782 = vpack.c.bf16 %v1687, %v1684
    %v1783 = vpack.c.bf16 %v1695, %v1692
    %v1784 = vpack.c.bf16 %v1703, %v1700
    %v1785 = vpack.c.bf16 %v1711, %v1708
    %v1786 = vpack.c.bf16 %v1719, %v1716
    %v1787 = vpack.c.bf16 %v1727, %v1724
    %v1788 = vpack.c.bf16 %v1735, %v1732
    %v1789 = vpack.c.bf16 %v1743, %v1740
    %v1790 = vpack.c.bf16 %v1751, %v1748
    %v1791 = vpack.c.bf16 %v1759, %v1756
    %v1792 = vpack.c.bf16 %v1767, %v1764
    %v1793 = vpack.c.bf16 %v1775, %v1772
    %v1794 = vld [vmem:[#allocation11] sm:$0xff]
    %v1795 = vld [vmem:[#allocation11 + $0x8] sm:$0xff]
    %v1796 = vld [vmem:[#allocation11 + $0x10] sm:$0xff]
    %v1797 = vld [vmem:[#allocation11 + $0x18] sm:$0xff]
    %v1802 = vunpack.c.l.b16 %v1794
    %v1803 = vunpack.c.h.b16 %v1794
    %v1804 = vunpack.c.l.b16 %v1795
    %v1805 = vunpack.c.h.b16 %v1795
    %v1806 = vunpack.c.l.b16 %v1796
    %v1807 = vunpack.c.h.b16 %v1796
    %v1808 = vunpack.c.l.b16 %v1797
    %v1809 = vunpack.c.h.b16 %v1797
    %v1810 = vpack.c.b16 %v1804, %v1802
    %v1811 = vpack.c.b16 %v1805, %v1803
    %v1812 = vpack.c.b16 %v1808, %v1806
    %v1813 = vpack.c.b16 %v1809, %v1807
    %1818 = vmatprep.subr.bf16.mxu0 0
    %1819 = vmatpush1.bf16.msra.mxu0 %v1785
    %1820 = vmatprep.subr.bf16.mxu0 0
    %1821 = vmatpush1.bf16.msra.mxu0 %v1784
    %1822 = vmatprep.subr.bf16.mxu0 0
    %1823 = vmatpush1.bf16.msra.mxu0 %v1783
    %1824 = vmatprep.subr.bf16.mxu0 0
    %1825 = vmatpush1.bf16.msra.mxu0 %v1782
    %1826 = vmatprep.subr.bf16.mxu0 0
    %1827 = vmatpush1.bf16.msra.mxu0 %v1781
    %1828 = vmatprep.subr.bf16.mxu0 0
    %1829 = vmatpush1.bf16.msra.mxu0 %v1780
    %1830 = vmatprep.subr.bf16.mxu0 0
    %1831 = vmatpush1.bf16.msra.mxu0 %v1779
    %1832 = vmatprep.subr.bf16.mxu0 0
    %1833 = vmatpush1.bf16.msra.mxu0 %v1778
    %1834 = vmatprep.subr.bf16.mxu0 0
    %1835 = vmatpush2.bf16.msra.mxu0 %v1793
    %1836 = vmatprep.subr.bf16.mxu0 0
    %1837 = vmatpush2.bf16.msra.mxu0 %v1792
    %1838 = vmatprep.subr.bf16.mxu0 0
    %1839 = vmatpush2.bf16.msra.mxu0 %v1791
    %1840 = vmatprep.subr.bf16.mxu0 0
    %1841 = vmatpush2.bf16.msra.mxu0 %v1790
    %1842 = vmatprep.subr.bf16.mxu0 0
    %1843 = vmatpush2.bf16.msra.mxu0 %v1789
    %1844 = vmatprep.subr.bf16.mxu0 0
    %1845 = vmatpush2.bf16.msra.mxu0 %v1788
    %1846 = vmatprep.subr.bf16.mxu0 0
    %1847 = vmatpush2.bf16.msra.mxu0 %v1787
    %1848 = vmatprep.subr.bf16.mxu0 0
    %1849 = vmatpush2.bf16.msra.mxu0 %v1786
    %1850 = vmatprep.mubr.bf16.mxu0 %v1811
    %1851 = vmatmul.mubr.bf16.gmra.mxu0 %v1810
    %v1852 = vpop.f32.mrf.mxu0
    %v1853 = vadd.f32 0.0, %v1852
    %v1854 = vpop.f32.mrf.mxu0
    %v1855 = vpop.f32.mrf.mxu0
    %v1856 = vadd.f32 0.0, %v1855
    %v1857 = vpop.f32.mrf.mxu0
    %1858 = vmatprep.mubr.bf16.mxu0 %v1813
    %1859 = vmatmul.mubr.bf16.gmra.mxu0 %v1812
    %v1860 = vpop.f32.mrf.mxu0
    %v1861 = vadd.f32 0.0, %v1860
    %v1862 = vpop.f32.mrf.mxu0
    %v1863 = vpop.f32.mrf.mxu0
    %v1864 = vadd.f32 0.0, %v1863
    %v1865 = vpop.f32.mrf.mxu0
    %1866 = vdwg.mxu0
    %v1867 = vpack.c.bf16 %v1856, %v1853
    %v1868 = vpack.c.bf16 %v1864, %v1861
    %v1869 = vld [vmem:[#allocation13] sm:$0xf]
    %v1870 = vld [vmem:[#allocation13 + $0x4] sm:$0xf]
    %v1871 = vld [vmem:[#allocation13 + $0x8] sm:$0xf]
    %v1872 = vld [vmem:[#allocation13 + $0xc] sm:$0xf]
    %v1873 = vld [vmem:[#allocation13 + $0x10] sm:$0xf]
    %v1874 = vld [vmem:[#allocation13 + $0x14] sm:$0xf]
    %v1875 = vld [vmem:[#allocation13 + $0x18] sm:$0xf]
    %v1876 = vld [vmem:[#allocation13 + $0x1c] sm:$0xf]
    %v1877 = vld [vmem:[#allocation13 + $0x20] sm:$0xf]
    %v1878 = vld [vmem:[#allocation13 + $0x24] sm:$0xf]
    %v1879 = vld [vmem:[#allocation13 + $0x28] sm:$0xf]
    %v1880 = vld [vmem:[#allocation13 + $0x2c] sm:$0xf]
    %v1881 = vld [vmem:[#allocation13 + $0x30] sm:$0xf]
    %v1882 = vld [vmem:[#allocation13 + $0x34] sm:$0xf]
    %v1883 = vld [vmem:[#allocation13 + $0x38] sm:$0xf]
    %v1884 = vld [vmem:[#allocation13 + $0x3c] sm:$0xf]
    %v1885 = vld [vmem:[%s10] sm:$0x1]
    %v1887 = vlaneseq
    %v1888 = vshrl.u32 %v1887, 7
    %v1889 = vsub.s32 0, %v1888
    %v1890 = vrot.slane %v1885, %v1889
    %v1908 = vunpack.c.l.b16 %v1869
    %v1909 = vunpack.c.l.b16 %v1870
    %v1910 = vunpack.c.l.b16 %v1871
    %v1911 = vunpack.c.l.b16 %v1872
    %v1912 = vunpack.c.l.b16 %v1873
    %v1913 = vunpack.c.l.b16 %v1874
    %v1914 = vunpack.c.l.b16 %v1875
    %v1915 = vunpack.c.l.b16 %v1876
    %v1916 = vunpack.c.l.b16 %v1877
    %v1917 = vunpack.c.l.b16 %v1878
    %v1918 = vunpack.c.l.b16 %v1879
    %v1919 = vunpack.c.l.b16 %v1880
    %v1920 = vunpack.c.l.b16 %v1881
    %v1921 = vunpack.c.l.b16 %v1882
    %v1922 = vunpack.c.l.b16 %v1883
    %v1923 = vunpack.c.l.b16 %v1884
    %v1924 = vpack.c.b16 %v1909, %v1908
    %v1925 = vpack.c.b16 %v1911, %v1910
    %v1926 = vpack.c.b16 %v1913, %v1912
    %v1927 = vpack.c.b16 %v1915, %v1914
    %v1928 = vpack.c.b16 %v1917, %v1916
    %v1929 = vpack.c.b16 %v1919, %v1918
    %v1930 = vpack.c.b16 %v1921, %v1920
    %v1931 = vpack.c.b16 %v1923, %v1922
    %1940 = vmatprep.subr.bf16.mxu0 0
    %1941 = vmatpush1.bf16.msra.mxu0 %v1931
    %1942 = vmatprep.subr.bf16.mxu0 0
    %1943 = vmatpush1.bf16.msra.mxu0 %v1930
    %1944 = vmatprep.subr.bf16.mxu0 0
    %1945 = vmatpush1.bf16.msra.mxu0 %v1929
    %1946 = vmatprep.subr.bf16.mxu0 0
    %1947 = vmatpush1.bf16.msra.mxu0 %v1928
    %1948 = vmatprep.subr.bf16.mxu0 0
    %1949 = vmatpush1.bf16.msra.mxu0 %v1927
    %1950 = vmatprep.subr.bf16.mxu0 0
    %1951 = vmatpush1.bf16.msra.mxu0 %v1926
    %1952 = vmatprep.subr.bf16.mxu0 0
    %1953 = vmatpush1.bf16.msra.mxu0 %v1925
    %1954 = vmatprep.subr.bf16.mxu0 0
    %1955 = vmatpush1.bf16.msra.mxu0 %v1924
    %1956 = vmatprep.subr.bf16.mxu0 0
    %1957 = vmatpush2.bf16.msra.mxu0 0
    %1958 = vmatprep.subr.bf16.mxu0 0
    %1959 = vmatpush2.bf16.msra.mxu0 0
    %1960 = vmatprep.subr.bf16.mxu0 0
    %1961 = vmatpush2.bf16.msra.mxu0 0
    %1962 = vmatprep.subr.bf16.mxu0 0
    %1963 = vmatpush2.bf16.msra.mxu0 0
    %1964 = vmatprep.subr.bf16.mxu0 0
    %1965 = vmatpush2.bf16.msra.mxu0 0
    %1966 = vmatprep.subr.bf16.mxu0 0
    %1967 = vmatpush2.bf16.msra.mxu0 0
    %1968 = vmatprep.subr.bf16.mxu0 0
    %1969 = vmatpush2.bf16.msra.mxu0 0
    %1970 = vmatprep.subr.bf16.mxu0 0
    %1971 = vmatpush2.bf16.msra.mxu0 0
    %1972 = vmatprep.mubr.bf16.mxu0 0
    %1973 = vmatmul.mubr.bf16.gmra.mxu0 %v1867
    %v1974 = vpop.f32.mrf.mxu0
    %v1975 = vadd.f32 %v1890, %v1974
    %v1976 = vpop.f32.mrf.mxu0
    %v1977 = vpop.f32.mrf.mxu0
    %v1978 = vadd.f32 %v1890, %v1977
    %v1979 = vpop.f32.mrf.mxu0
    %1980 = vmatprep.mubr.bf16.mxu0 0
    %1981 = vmatmul.mubr.bf16.gmra.mxu0 %v1868
    %v1982 = vpop.f32.mrf.mxu0
    %v1983 = vadd.f32 %v1890, %v1982
    %v1984 = vpop.f32.mrf.mxu0
    %v1985 = vpop.f32.mrf.mxu0
    %v1986 = vadd.f32 %v1890, %v1985
    %v1987 = vpop.f32.mrf.mxu0
    %1988 = vdwg.mxu0
    %1989 = vst [vmem:[#allocation14] sm:$0xff] %v1975
    %1990 = vst [vmem:[#allocation14 + $0x8] sm:$0xff] %v1978
    %1991 = vst [vmem:[#allocation14 + $0x10] sm:$0xff] %v1983
    %1992 = vst [vmem:[#allocation14 + $0x18] sm:$0xff] %v1986
    // Predicated region
    $region74: #{tpu_custom_call.1} parent=1 // pred_check
      _
    $region75: #{tpu_custom_call.1} parent=1 // pred_check_branch
      %1994 = sbr.rel (0) target = $region77
    $region76: #{tpu_custom_call.1} parent=1 // pred_region
      %s1996 = ssub.s32 512, 512
      %1997 = vsyncadd [#allocation4], %s1996
      %s1998 = sshll.u32 [#allocation14], 4
      %s1999 = int_to_ptr.vmem [resolvable:$true] %s1998
      %2004 = dma.vmem_to_hbm [thread:$0]  %s1999, 512, %s11, [#allocation4], 128, 128, 8
    $region77: #{tpu_custom_call.1} parent=1 // pred_fallthru
      _
    // Predicated region
    $region78: #{tpu_custom_call.1} parent=1 // pred_check
      _
    $region79: #{tpu_custom_call.1} parent=1 // pred_check_branch
      %2006 = sbr.rel (0) target = $region81
    $region80: #{tpu_custom_call.1} parent=1 // pred_region
      %2007 = dma.done [#allocation4], 512
    $region81: #{tpu_custom_call.1} parent=1 // pred_fallthru
      _
    %2008 = vsyncpa [#allocation3], 1
    %2009 = vsyncpa [#allocation6], 1
    %2010 = vsyncpa [#allocation9], 1
    %2011 = vsyncpa [#allocation12], 1
    %2012 = vsyncpa [#allocation4], 1

</llo_original>
